<compile_context>
chip_gen: v6e
topology: v6e:2x2x1
jax: 0.10.0
libtpu: 0.0.40
codegen_flags: <defaults>
</compile_context>

<pallas_src>
import math

import jax
import jax.numpy as jnp
from jax.experimental import pallas as pl
from jax.experimental.pallas import tpu as pltpu


EMOTION_IN = 27    # fixed by the module (27 emotion categories)
EMOTION_PAD = 32   # zero-padded K for a dense MXU feed
MAX_BATCH_TILE = 128

_ARG_ORDER = [
    "we1", "be1", "we2", "be2",
    "wm1", "bm1", "wm2", "bm2",
    "wb1m", "wb1e", "bb1", "wb2", "bb2",
    "ws1m", "ws1e", "bs1", "ws2", "bs2",
]


def _fused_mlp_kernel(
    mem_ref, emo_ref,
    we1, be1, we2, be2,                 # emotion_encoder
    wm1, bm1, wm2, bm2,                 # memory_encoder
    wb1m, wb1e, bb1, wb2, bb2,          # emotional_binding (first layer split)
    ws1m, ws1e, bs1, ws2, bs2,          # significance_predictor (first layer split)
    out_mem_ref, out_sig_ref,
):
    f32 = jnp.float32
    bf16 = jnp.bfloat16

    mem = mem_ref[...]   # f32 activations
    emo = emo_ref[...]

    def dot(x, w_ref):
        # bf16 MXU matmul, f32 accumulation.
        return jnp.dot(x.astype(bf16), w_ref[...], preferred_element_type=f32)

    # emotion_encoder: Linear -> ReLU -> Dropout(eval: identity) -> Linear
    e1 = jnp.maximum(dot(emo, we1) + be1[...], 0.0)
    e = dot(e1, we2) + be2[...]

    # memory_encoder: Linear -> ReLU -> Linear
    m1 = jnp.maximum(dot(mem, wm1) + bm1[...], 0.0)
    m = dot(m1, wm2) + bm2[...]

    # emotional_binding: Linear(cat[m, e]) -> ReLU -> Linear -> Tanh
    b1 = jnp.maximum(dot(m, wb1m) + dot(e, wb1e) + bb1[...], 0.0)
    em = jnp.tanh(dot(b1, wb2) + bb2[...])

    # significance_predictor: Linear(cat[em, e]) -> ReLU -> Linear(->1) -> Sigmoid
    s1 = jnp.maximum(dot(em, ws1m) + dot(e, ws1e) + bs1[...], 0.0)
    # final 128 -> 1 projection on the VPU + XLU lane reduce (no N=1 MXU matmul)
    sig = jax.nn.sigmoid(
        jnp.sum(s1 * ws2[...].astype(f32), axis=-1, keepdims=True) + bs2[...])

    out_mem_ref[...] = em.astype(out_mem_ref.dtype)
    out_sig_ref[...] = sig.astype(out_sig_ref.dtype)


@jax.jit
def emotional_encoding_forward(memory_embedding, emotional_state, params):
    B, memory_dim = memory_embedding.shape

    # Zero-pad emotion features 27 -> 32 (matches the zero-padded we1 rows).
    k_pad = params["we1"].shape[0]
    k_in = emotional_state.shape[-1]
    if k_in < k_pad:
        emotional_state = jnp.pad(emotional_state, ((0, 0), (0, k_pad - k_in)))

    # Batch tiling: sublane-align, pick a tile that divides the padded batch.
    b_align = max(8, -(-B // 8) * 8)
    tb = min(MAX_BATCH_TILE, b_align)
    b_pad = -(-b_align // tb) * tb
    if b_pad != B:
        memory_embedding = jnp.pad(memory_embedding, ((0, b_pad - B), (0, 0)))
        emotional_state = jnp.pad(emotional_state, ((0, b_pad - B), (0, 0)))

    weights = [params[k] for k in _ARG_ORDER]
    args = [memory_embedding, emotional_state] + weights

    grid = (b_pad // tb,)

    def batch_spec(dim):
        return pl.BlockSpec((tb, dim), lambda i: (i, 0))

    def resident_spec(shape):
        # Same block for every grid step -> weights stay resident in VMEM.
        return pl.BlockSpec(shape, lambda i: (0, 0))

    in_specs = [batch_spec(memory_dim), batch_spec(k_pad)] + [
        resident_spec(w.shape) for w in weights
    ]
    out_specs = (batch_spec(memory_dim), batch_spec(1))

    out_shapes = (
        jax.ShapeDtypeStruct((b_pad, memory_dim), jnp.float32),  # emotional_memory
        jax.ShapeDtypeStruct((b_pad, 1), jnp.float32),           # significance
    )

    # Advisory cost estimate so XLA schedules/overlaps the custom call sanely.
    total_w_elems = sum(int(w.size) for w in weights)
    w_bytes = sum(int(w.size) * w.dtype.itemsize for w in weights)
    cost = pl.CostEstimate(
        flops=2 * b_pad * total_w_elems,
        transcendentals=b_pad * (memory_dim + 1),
        bytes_accessed=w_bytes + b_pad * (2 * memory_dim + k_pad + 1) * 4,
    )

    em, sig = pl.pallas_call(
        _fused_mlp_kernel,
        out_shape=out_shapes,
        grid=grid,
        in_specs=in_specs,
        out_specs=out_specs,
        compiler_params=pltpu.CompilerParams(
            dimension_semantics=("parallel",)),
        cost_estimate=cost,
    )(*args)

    return em[:B], sig[:B]


def init_params(key, memory_dim=256, emotion_dim=128):
    """PyTorch-style (uniform +/- 1/sqrt(fan_in)) init.

    Weights are stored (in, out) — transposed vs nn.Linear — and cast to bf16.
    Biases are (1, out) f32.  we1 is zero-padded 27 -> 32 rows.  ws2 is stored
    as a lane-dense (1, 128) row for the VPU significance projection.
    """
    dm = memory_dim
    de = emotion_dim
    dmh = memory_dim // 2

    def linear(key, fan_in, fan_out):
        kw, kb = jax.random.split(key)
        bound = 1.0 / math.sqrt(fan_in)
        w = jax.random.uniform(kw, (fan_in, fan_out), jnp.float32, -bound, bound)
        b = jax.random.uniform(kb, (1, fan_out), jnp.float32, -bound, bound)
        return w, b

    keys = jax.random.split(key, 8)

    we1, be1 = linear(keys[0], EMOTION_IN, de)
    we1 = jnp.pad(we1, ((0, EMOTION_PAD - EMOTION_IN), (0, 0)))  # zero rows -> no effect
    we2, be2 = linear(keys[1], de, de)
    wm1, bm1 = linear(keys[2], dm, dm)
    wm2, bm2 = linear(keys[3], dm, dmh)
    wb1, bb1 = linear(keys[4], dmh + de, dm)
    wb2, bb2 = linear(keys[5], dm, dm)
    ws1, bs1 = linear(keys[6], dm + de, 128)
    ws2, bs2 = linear(keys[7], 128, 1)

    bf = lambda x: x.astype(jnp.bfloat16)
    return {
        "we1": bf(we1), "be1": be1, "we2": bf(we2), "be2": be2,
        "wm1": bf(wm1), "bm1": bm1, "wm2": bf(wm2), "bm2": bm2,
        "wb1m": bf(wb1[:dmh]), "wb1e": bf(wb1[dmh:]), "bb1": bb1,
        "wb2": bf(wb2), "bb2": bb2,
        "ws1m": bf(ws1[:dm]), "ws1e": bf(ws1[dm:]), "bs1": bs1,
        "ws2": bf(ws2.T), "bs2": bs2,
    }


def reference_forward(memory_embedding, emotional_state, params):
    """Pure-JAX reference mirroring the PyTorch forward (eval mode),
    with the same bf16-matmul / f32-accumulate numerics as the kernel."""
    p = params
    f32 = jnp.float32
    bf16 = jnp.bfloat16

    def dot(x, w):
        return jnp.dot(x.astype(bf16), w.astype(bf16), preferred_element_type=f32)

    k_pad = p["we1"].shape[0]
    emo = jnp.pad(emotional_state,
                  ((0, 0), (0, k_pad - emotional_state.shape[-1])))

    e1 = jax.nn.relu(dot(emo, p["we1"]) + p["be1"])
    e = dot(e1, p["we2"]) + p["be2"]

    m1 = jax.nn.relu(dot(memory_embedding, p["wm1"]) + p["bm1"])
    m = dot(m1, p["wm2"]) + p["bm2"]

    combined = jnp.concatenate([m, e], axis=-1)
    wb1 = jnp.concatenate([p["wb1m"], p["wb1e"]], axis=0)
    b1 = jax.nn.relu(dot(combined, wb1) + p["bb1"])
    em = jnp.tanh(dot(b1, p["wb2"]) + p["bb2"])

    sig_in = jnp.concatenate([em, e], axis=-1)
    ws1 = jnp.concatenate([p["ws1m"], p["ws1e"]], axis=0)
    s1 = jax.nn.relu(dot(sig_in, ws1) + p["bs1"])
    sig = jax.nn.sigmoid(
        jnp.sum(s1 * p["ws2"].astype(f32), axis=-1, keepdims=True) + p["bs2"])
    return em, sig


if __name__ == "__main__":
    batch = 8
    memory_dim = 256
    emotion_dim = 128

    key = jax.random.PRNGKey(0)
    k_params, k_mem, k_emo = jax.random.split(key, 3)

    params = init_params(k_params, memory_dim=memory_dim, emotion_dim=emotion_dim)
    memory_embedding = jax.random.normal(k_mem, (batch, memory_dim), jnp.float32)
    emotional_state = jax.random.uniform(k_emo, (batch, EMOTION_IN), jnp.float32)

    em, sig = emotional_encoding_forward(memory_embedding, emotional_state, params)
    jax.block_until_ready((em, sig))

    em_ref, sig_ref = reference_forward(memory_embedding, emotional_state, params)
    assert em.shape == (batch, memory_dim) and sig.shape == (batch, 1)
    assert bool(jnp.all(jnp.isfinite(em))) and bool(jnp.all(jnp.isfinite(sig)))
    assert jnp.allclose(em, em_ref, atol=2e-3, rtol=2e-3)
    assert jnp.allclose(sig, sig_ref, atol=2e-3, rtol=2e-3)

    print("KERNEL_OK")
</pallas_src>

<mosaic_0001>
module attributes {stable_mosaic.version = 11 : i64} {
  func.func @_fused_mlp_kernel(%arg0: i32, %arg1: memref<8x256xf32, #tpu.memory_space<vmem>>, %arg2: memref<8x32xf32, #tpu.memory_space<vmem>>, %arg3: memref<32x128xbf16, #tpu.memory_space<vmem>>, %arg4: memref<1x128xf32, #tpu.memory_space<vmem>>, %arg5: memref<128x128xbf16, #tpu.memory_space<vmem>>, %arg6: memref<1x128xf32, #tpu.memory_space<vmem>>, %arg7: memref<256x256xbf16, #tpu.memory_space<vmem>>, %arg8: memref<1x256xf32, #tpu.memory_space<vmem>>, %arg9: memref<256x128xbf16, #tpu.memory_space<vmem>>, %arg10: memref<1x128xf32, #tpu.memory_space<vmem>>, %arg11: memref<128x256xbf16, #tpu.memory_space<vmem>>, %arg12: memref<128x256xbf16, #tpu.memory_space<vmem>>, %arg13: memref<1x256xf32, #tpu.memory_space<vmem>>, %arg14: memref<256x256xbf16, #tpu.memory_space<vmem>>, %arg15: memref<1x256xf32, #tpu.memory_space<vmem>>, %arg16: memref<256x128xbf16, #tpu.memory_space<vmem>>, %arg17: memref<128x128xbf16, #tpu.memory_space<vmem>>, %arg18: memref<1x128xf32, #tpu.memory_space<vmem>>, %arg19: memref<1x128xbf16, #tpu.memory_space<vmem>>, %arg20: memref<1x1xf32, #tpu.memory_space<vmem>>, %arg21: memref<8x256xf32, #tpu.memory_space<vmem>>, %arg22: memref<8x1xf32, #tpu.memory_space<vmem>>) attributes {dimension_semantics = [#tpu.dimension_semantics<parallel>], iteration_bounds = array<i64: 1>, scalar_prefetch = 0 : i64, scratch_operands = 0 : i64, tpu.core_type = #tpu.core_type<tc>, window_params = [{transform_indices = @transform_0, window_bounds = array<i64: 8, 256>}, {transform_indices = @transform_1, window_bounds = array<i64: 8, 32>}, {pipeline_mode = #tpu.pipeline_mode<synchronous>, transform_indices = @transform_2, window_bounds = array<i64: 32, 128>}, {pipeline_mode = #tpu.pipeline_mode<synchronous>, transform_indices = @transform_3, window_bounds = array<i64: 1, 128>}, {pipeline_mode = #tpu.pipeline_mode<synchronous>, transform_indices = @transform_4, window_bounds = array<i64: 128, 128>}, {pipeline_mode = #tpu.pipeline_mode<synchronous>, transform_indices = @transform_5, window_bounds = array<i64: 1, 128>}, {pipeline_mode = #tpu.pipeline_mode<synchronous>, transform_indices = @transform_6, window_bounds = array<i64: 256, 256>}, {pipeline_mode = #tpu.pipeline_mode<synchronous>, transform_indices = @transform_7, window_bounds = array<i64: 1, 256>}, {pipeline_mode = #tpu.pipeline_mode<synchronous>, transform_indices = @transform_8, window_bounds = array<i64: 256, 128>}, {pipeline_mode = #tpu.pipeline_mode<synchronous>, transform_indices = @transform_9, window_bounds = array<i64: 1, 128>}, {pipeline_mode = #tpu.pipeline_mode<synchronous>, transform_indices = @transform_10, window_bounds = array<i64: 128, 256>}, {pipeline_mode = #tpu.pipeline_mode<synchronous>, transform_indices = @transform_11, window_bounds = array<i64: 128, 256>}, {pipeline_mode = #tpu.pipeline_mode<synchronous>, transform_indices = @transform_12, window_bounds = array<i64: 1, 256>}, {pipeline_mode = #tpu.pipeline_mode<synchronous>, transform_indices = @transform_13, window_bounds = array<i64: 256, 256>}, {pipeline_mode = #tpu.pipeline_mode<synchronous>, transform_indices = @transform_14, window_bounds = array<i64: 1, 256>}, {pipeline_mode = #tpu.pipeline_mode<synchronous>, transform_indices = @transform_15, window_bounds = array<i64: 256, 128>}, {pipeline_mode = #tpu.pipeline_mode<synchronous>, transform_indices = @transform_16, window_bounds = array<i64: 128, 128>}, {pipeline_mode = #tpu.pipeline_mode<synchronous>, transform_indices = @transform_17, window_bounds = array<i64: 1, 128>}, {pipeline_mode = #tpu.pipeline_mode<synchronous>, transform_indices = @transform_18, window_bounds = array<i64: 1, 128>}, {pipeline_mode = #tpu.pipeline_mode<synchronous>, transform_indices = @transform_19, window_bounds = array<i64: 1, 1>}, {transform_indices = @transform_20, window_bounds = array<i64: 8, 256>}, {transform_indices = @transform_21, window_bounds = array<i64: 8, 1>}]} {
    %c0 = arith.constant 0 : index
    %c0_0 = arith.constant 0 : index
    %0 = vector.load %arg1[%c0, %c0_0] : memref<8x256xf32, #tpu.memory_space<vmem>>, vector<8x256xf32>
    %c0_1 = arith.constant 0 : index
    %c0_2 = arith.constant 0 : index
    %1 = vector.load %arg2[%c0_1, %c0_2] : memref<8x32xf32, #tpu.memory_space<vmem>>, vector<8x32xf32>
    %2 = arith.truncf %1 : vector<8x32xf32> to vector<8x32xbf16>
    %c0_3 = arith.constant 0 : index
    %c0_4 = arith.constant 0 : index
    %3 = vector.load %arg3[%c0_3, %c0_4] : memref<32x128xbf16, #tpu.memory_space<vmem>>, vector<32x128xbf16>
    %cst = arith.constant dense<0.000000e+00> : vector<8x128xf32>
    %4 = tpu.matmul %2, %3, %cst {dimension_numbers = #tpu.dot_dimension_numbers<[1], [0], [0], [1], [0, 0, 1, 1], [], []>} : vector<8x32xbf16>, vector<32x128xbf16>, vector<8x128xf32> -> vector<8x128xf32>
    %c0_5 = arith.constant 0 : index
    %c0_6 = arith.constant 0 : index
    %5 = vector.load %arg4[%c0_5, %c0_6] : memref<1x128xf32, #tpu.memory_space<vmem>>, vector<1x128xf32>
    %6 = vector.broadcast %5 : vector<1x128xf32> to vector<8x128xf32>
    %7 = arith.addf %4, %6 : vector<8x128xf32>
    %cst_7 = arith.constant 0.000000e+00 : f32
    %8 = vector.broadcast %cst_7 : f32 to vector<8x128xf32>
    %9 = arith.maximumf %7, %8 : vector<8x128xf32>
    %10 = arith.truncf %9 : vector<8x128xf32> to vector<8x128xbf16>
    %c0_8 = arith.constant 0 : index
    %c0_9 = arith.constant 0 : index
    %11 = vector.load %arg5[%c0_8, %c0_9] : memref<128x128xbf16, #tpu.memory_space<vmem>>, vector<128x128xbf16>
    %cst_10 = arith.constant dense<0.000000e+00> : vector<8x128xf32>
    %12 = tpu.matmul %10, %11, %cst_10 {dimension_numbers = #tpu.dot_dimension_numbers<[1], [0], [0], [1], [0, 0, 1, 1], [], []>} : vector<8x128xbf16>, vector<128x128xbf16>, vector<8x128xf32> -> vector<8x128xf32>
    %c0_11 = arith.constant 0 : index
    %c0_12 = arith.constant 0 : index
    %13 = vector.load %arg6[%c0_11, %c0_12] : memref<1x128xf32, #tpu.memory_space<vmem>>, vector<1x128xf32>
    %14 = vector.broadcast %13 : vector<1x128xf32> to vector<8x128xf32>
    %15 = arith.addf %12, %14 : vector<8x128xf32>
    %16 = arith.truncf %0 : vector<8x256xf32> to vector<8x256xbf16>
    %c0_13 = arith.constant 0 : index
    %c0_14 = arith.constant 0 : index
    %17 = vector.load %arg7[%c0_13, %c0_14] : memref<256x256xbf16, #tpu.memory_space<vmem>>, vector<256x256xbf16>
    %cst_15 = arith.constant dense<0.000000e+00> : vector<8x256xf32>
    %18 = tpu.matmul %16, %17, %cst_15 {dimension_numbers = #tpu.dot_dimension_numbers<[1], [0], [0], [1], [0, 0, 1, 1], [], []>} : vector<8x256xbf16>, vector<256x256xbf16>, vector<8x256xf32> -> vector<8x256xf32>
    %c0_16 = arith.constant 0 : index
    %c0_17 = arith.constant 0 : index
    %19 = vector.load %arg8[%c0_16, %c0_17] : memref<1x256xf32, #tpu.memory_space<vmem>>, vector<1x256xf32>
    %20 = vector.broadcast %19 : vector<1x256xf32> to vector<8x256xf32>
    %21 = arith.addf %18, %20 : vector<8x256xf32>
    %cst_18 = arith.constant 0.000000e+00 : f32
    %22 = vector.broadcast %cst_18 : f32 to vector<8x256xf32>
    %23 = arith.maximumf %21, %22 : vector<8x256xf32>
    %24 = arith.truncf %23 : vector<8x256xf32> to vector<8x256xbf16>
    %c0_19 = arith.constant 0 : index
    %c0_20 = arith.constant 0 : index
    %25 = vector.load %arg9[%c0_19, %c0_20] : memref<256x128xbf16, #tpu.memory_space<vmem>>, vector<256x128xbf16>
    %cst_21 = arith.constant dense<0.000000e+00> : vector<8x128xf32>
    %26 = tpu.matmul %24, %25, %cst_21 {dimension_numbers = #tpu.dot_dimension_numbers<[1], [0], [0], [1], [0, 0, 1, 1], [], []>} : vector<8x256xbf16>, vector<256x128xbf16>, vector<8x128xf32> -> vector<8x128xf32>
    %c0_22 = arith.constant 0 : index
    %c0_23 = arith.constant 0 : index
    %27 = vector.load %arg10[%c0_22, %c0_23] : memref<1x128xf32, #tpu.memory_space<vmem>>, vector<1x128xf32>
    %28 = vector.broadcast %27 : vector<1x128xf32> to vector<8x128xf32>
    %29 = arith.addf %26, %28 : vector<8x128xf32>
    %30 = arith.truncf %29 : vector<8x128xf32> to vector<8x128xbf16>
    %c0_24 = arith.constant 0 : index
    %c0_25 = arith.constant 0 : index
    %31 = vector.load %arg11[%c0_24, %c0_25] : memref<128x256xbf16, #tpu.memory_space<vmem>>, vector<128x256xbf16>
    %cst_26 = arith.constant dense<0.000000e+00> : vector<8x256xf32>
    %32 = tpu.matmul %30, %31, %cst_26 {dimension_numbers = #tpu.dot_dimension_numbers<[1], [0], [0], [1], [0, 0, 1, 1], [], []>} : vector<8x128xbf16>, vector<128x256xbf16>, vector<8x256xf32> -> vector<8x256xf32>
    %33 = arith.truncf %15 : vector<8x128xf32> to vector<8x128xbf16>
    %c0_27 = arith.constant 0 : index
    %c0_28 = arith.constant 0 : index
    %34 = vector.load %arg12[%c0_27, %c0_28] : memref<128x256xbf16, #tpu.memory_space<vmem>>, vector<128x256xbf16>
    %cst_29 = arith.constant dense<0.000000e+00> : vector<8x256xf32>
    %35 = tpu.matmul %33, %34, %cst_29 {dimension_numbers = #tpu.dot_dimension_numbers<[1], [0], [0], [1], [0, 0, 1, 1], [], []>} : vector<8x128xbf16>, vector<128x256xbf16>, vector<8x256xf32> -> vector<8x256xf32>
    %36 = arith.addf %32, %35 : vector<8x256xf32>
    %c0_30 = arith.constant 0 : index
    %c0_31 = arith.constant 0 : index
    %37 = vector.load %arg13[%c0_30, %c0_31] : memref<1x256xf32, #tpu.memory_space<vmem>>, vector<1x256xf32>
    %38 = vector.broadcast %37 : vector<1x256xf32> to vector<8x256xf32>
    %39 = arith.addf %36, %38 : vector<8x256xf32>
    %cst_32 = arith.constant 0.000000e+00 : f32
    %40 = vector.broadcast %cst_32 : f32 to vector<8x256xf32>
    %41 = arith.maximumf %39, %40 : vector<8x256xf32>
    %42 = arith.truncf %41 : vector<8x256xf32> to vector<8x256xbf16>
    %c0_33 = arith.constant 0 : index
    %c0_34 = arith.constant 0 : index
    %43 = vector.load %arg14[%c0_33, %c0_34] : memref<256x256xbf16, #tpu.memory_space<vmem>>, vector<256x256xbf16>
    %cst_35 = arith.constant dense<0.000000e+00> : vector<8x256xf32>
    %44 = tpu.matmul %42, %43, %cst_35 {dimension_numbers = #tpu.dot_dimension_numbers<[1], [0], [0], [1], [0, 0, 1, 1], [], []>} : vector<8x256xbf16>, vector<256x256xbf16>, vector<8x256xf32> -> vector<8x256xf32>
    %c0_36 = arith.constant 0 : index
    %c0_37 = arith.constant 0 : index
    %45 = vector.load %arg15[%c0_36, %c0_37] : memref<1x256xf32, #tpu.memory_space<vmem>>, vector<1x256xf32>
    %46 = vector.broadcast %45 : vector<1x256xf32> to vector<8x256xf32>
    %47 = arith.addf %44, %46 : vector<8x256xf32>
    %48 = math.tanh %47 : vector<8x256xf32>
    %49 = arith.truncf %48 : vector<8x256xf32> to vector<8x256xbf16>
    %c0_38 = arith.constant 0 : index
    %c0_39 = arith.constant 0 : index
    %50 = vector.load %arg16[%c0_38, %c0_39] : memref<256x128xbf16, #tpu.memory_space<vmem>>, vector<256x128xbf16>
    %cst_40 = arith.constant dense<0.000000e+00> : vector<8x128xf32>
    %51 = tpu.matmul %49, %50, %cst_40 {dimension_numbers = #tpu.dot_dimension_numbers<[1], [0], [0], [1], [0, 0, 1, 1], [], []>} : vector<8x256xbf16>, vector<256x128xbf16>, vector<8x128xf32> -> vector<8x128xf32>
    %52 = arith.truncf %15 : vector<8x128xf32> to vector<8x128xbf16>
    %c0_41 = arith.constant 0 : index
    %c0_42 = arith.constant 0 : index
    %53 = vector.load %arg17[%c0_41, %c0_42] : memref<128x128xbf16, #tpu.memory_space<vmem>>, vector<128x128xbf16>
    %cst_43 = arith.constant dense<0.000000e+00> : vector<8x128xf32>
    %54 = tpu.matmul %52, %53, %cst_43 {dimension_numbers = #tpu.dot_dimension_numbers<[1], [0], [0], [1], [0, 0, 1, 1], [], []>} : vector<8x128xbf16>, vector<128x128xbf16>, vector<8x128xf32> -> vector<8x128xf32>
    %55 = arith.addf %51, %54 : vector<8x128xf32>
    %c0_44 = arith.constant 0 : index
    %c0_45 = arith.constant 0 : index
    %56 = vector.load %arg18[%c0_44, %c0_45] : memref<1x128xf32, #tpu.memory_space<vmem>>, vector<1x128xf32>
    %57 = vector.broadcast %56 : vector<1x128xf32> to vector<8x128xf32>
    %58 = arith.addf %55, %57 : vector<8x128xf32>
    %cst_46 = arith.constant 0.000000e+00 : f32
    %59 = vector.broadcast %cst_46 : f32 to vector<8x128xf32>
    %60 = arith.maximumf %58, %59 : vector<8x128xf32>
    %c0_47 = arith.constant 0 : index
    %c0_48 = arith.constant 0 : index
    %61 = vector.load %arg19[%c0_47, %c0_48] : memref<1x128xbf16, #tpu.memory_space<vmem>>, vector<1x128xbf16>
    %62 = arith.extf %61 : vector<1x128xbf16> to vector<1x128xf32>
    %63 = vector.broadcast %62 : vector<1x128xf32> to vector<8x128xf32>
    %64 = arith.mulf %60, %63 : vector<8x128xf32>
    %cst_49 = arith.constant dense<0.000000e+00> : vector<8xf32>
    %65 = vector.multi_reduction <add>, %64, %cst_49 [1] : vector<8x128xf32> to vector<8xf32>
    %66 = vector.shape_cast %65 : vector<8xf32> to vector<8x1xf32>
    %c0_50 = arith.constant 0 : index
    %c0_51 = arith.constant 0 : index
    %67 = vector.load %arg20[%c0_50, %c0_51] : memref<1x1xf32, #tpu.memory_space<vmem>>, vector<1x1xf32>
    %68 = vector.broadcast %67 : vector<1x1xf32> to vector<8x1xf32>
    %69 = arith.addf %66, %68 : vector<8x1xf32>
    %70 = arith.negf %69 : vector<8x1xf32>
    %71 = math.exp %70 : vector<8x1xf32>
    %cst_52 = arith.constant 1.000000e+00 : f32
    %72 = vector.broadcast %cst_52 : f32 to vector<8x1xf32>
    %73 = arith.addf %72, %71 : vector<8x1xf32>
    %74 = arith.divf %72, %73 : vector<8x1xf32>
    %c0_53 = arith.constant 0 : index
    %c0_54 = arith.constant 0 : index
    %75 = vector.load %arg21[%c0_53, %c0_54] : memref<8x256xf32, #tpu.memory_space<vmem>>, vector<8x256xf32>
    tpu.vector_store %arg21[%c0_53, %c0_54], %48 {strides = array<i32>} : memref<8x256xf32, #tpu.memory_space<vmem>>, vector<8x256xf32>,
    %c0_55 = arith.constant 0 : index
    %c0_56 = arith.constant 0 : index
    %76 = vector.load %arg22[%c0_55, %c0_56] : memref<8x1xf32, #tpu.memory_space<vmem>>, vector<8x1xf32>
    tpu.vector_store %arg22[%c0_55, %c0_56], %74 {strides = array<i32>} : memref<8x1xf32, #tpu.memory_space<vmem>>, vector<8x1xf32>,
    return
  }
  func.func @transform_0(%arg0: i32) -> (i32, i32) {
    %c0_i32 = arith.constant 0 : i32
    %c0_i32_0 = arith.constant 0 : i32
    return %arg0, %c0_i32 : i32, i32
  }
  func.func @transform_1(%arg0: i32) -> (i32, i32) {
    %c0_i32 = arith.constant 0 : i32
    %c0_i32_0 = arith.constant 0 : i32
    return %arg0, %c0_i32 : i32, i32
  }
  func.func @transform_2(%arg0: i32) -> (i32, i32) {
    %c0_i32 = arith.constant 0 : i32
    %c0_i32_0 = arith.constant 0 : i32
    %c0_i32_1 = arith.constant 0 : i32
    return %c0_i32, %c0_i32_0 : i32, i32
  }
  func.func @transform_3(%arg0: i32) -> (i32, i32) {
    %c0_i32 = arith.constant 0 : i32
    %c0_i32_0 = arith.constant 0 : i32
    %c0_i32_1 = arith.constant 0 : i32
    return %c0_i32, %c0_i32_0 : i32, i32
  }
  func.func @transform_4(%arg0: i32) -> (i32, i32) {
    %c0_i32 = arith.constant 0 : i32
    %c0_i32_0 = arith.constant 0 : i32
    %c0_i32_1 = arith.constant 0 : i32
    return %c0_i32, %c0_i32_0 : i32, i32
  }
  func.func @transform_5(%arg0: i32) -> (i32, i32) {
    %c0_i32 = arith.constant 0 : i32
    %c0_i32_0 = arith.constant 0 : i32
    %c0_i32_1 = arith.constant 0 : i32
    return %c0_i32, %c0_i32_0 : i32, i32
  }
  func.func @transform_6(%arg0: i32) -> (i32, i32) {
    %c0_i32 = arith.constant 0 : i32
    %c0_i32_0 = arith.constant 0 : i32
    %c0_i32_1 = arith.constant 0 : i32
    return %c0_i32, %c0_i32_0 : i32, i32
  }
  func.func @transform_7(%arg0: i32) -> (i32, i32) {
    %c0_i32 = arith.constant 0 : i32
    %c0_i32_0 = arith.constant 0 : i32
    %c0_i32_1 = arith.constant 0 : i32
    return %c0_i32, %c0_i32_0 : i32, i32
  }
  func.func @transform_8(%arg0: i32) -> (i32, i32) {
    %c0_i32 = arith.constant 0 : i32
    %c0_i32_0 = arith.constant 0 : i32
    %c0_i32_1 = arith.constant 0 : i32
    return %c0_i32, %c0_i32_0 : i32, i32
  }
  func.func @transform_9(%arg0: i32) -> (i32, i32) {
    %c0_i32 = arith.constant 0 : i32
    %c0_i32_0 = arith.constant 0 : i32
    %c0_i32_1 = arith.constant 0 : i32
    return %c0_i32, %c0_i32_0 : i32, i32
  }
  func.func @transform_10(%arg0: i32) -> (i32, i32) {
    %c0_i32 = arith.constant 0 : i32
    %c0_i32_0 = arith.constant 0 : i32
    %c0_i32_1 = arith.constant 0 : i32
    return %c0_i32, %c0_i32_0 : i32, i32
  }
  func.func @transform_11(%arg0: i32) -> (i32, i32) {
    %c0_i32 = arith.constant 0 : i32
    %c0_i32_0 = arith.constant 0 : i32
    %c0_i32_1 = arith.constant 0 : i32
    return %c0_i32, %c0_i32_0 : i32, i32
  }
  func.func @transform_12(%arg0: i32) -> (i32, i32) {
    %c0_i32 = arith.constant 0 : i32
    %c0_i32_0 = arith.constant 0 : i32
    %c0_i32_1 = arith.constant 0 : i32
    return %c0_i32, %c0_i32_0 : i32, i32
  }
  func.func @transform_13(%arg0: i32) -> (i32, i32) {
    %c0_i32 = arith.constant 0 : i32
    %c0_i32_0 = arith.constant 0 : i32
    %c0_i32_1 = arith.constant 0 : i32
    return %c0_i32, %c0_i32_0 : i32, i32
  }
  func.func @transform_14(%arg0: i32) -> (i32, i32) {
    %c0_i32 = arith.constant 0 : i32
    %c0_i32_0 = arith.constant 0 : i32
    %c0_i32_1 = arith.constant 0 : i32
    return %c0_i32, %c0_i32_0 : i32, i32
  }
  func.func @transform_15(%arg0: i32) -> (i32, i32) {
    %c0_i32 = arith.constant 0 : i32
    %c0_i32_0 = arith.constant 0 : i32
    %c0_i32_1 = arith.constant 0 : i32
    return %c0_i32, %c0_i32_0 : i32, i32
  }
  func.func @transform_16(%arg0: i32) -> (i32, i32) {
    %c0_i32 = arith.constant 0 : i32
    %c0_i32_0 = arith.constant 0 : i32
    %c0_i32_1 = arith.constant 0 : i32
    return %c0_i32, %c0_i32_0 : i32, i32
  }
  func.func @transform_17(%arg0: i32) -> (i32, i32) {
    %c0_i32 = arith.constant 0 : i32
    %c0_i32_0 = arith.constant 0 : i32
    %c0_i32_1 = arith.constant 0 : i32
    return %c0_i32, %c0_i32_0 : i32, i32
  }
  func.func @transform_18(%arg0: i32) -> (i32, i32) {
    %c0_i32 = arith.constant 0 : i32
    %c0_i32_0 = arith.constant 0 : i32
    %c0_i32_1 = arith.constant 0 : i32
    return %c0_i32, %c0_i32_0 : i32, i32
  }
  func.func @transform_19(%arg0: i32) -> (i32, i32) {
    %c0_i32 = arith.constant 0 : i32
    %c0_i32_0 = arith.constant 0 : i32
    %c0_i32_1 = arith.constant 0 : i32
    return %c0_i32, %c0_i32_0 : i32, i32
  }
  func.func @transform_20(%arg0: i32) -> (i32, i32) {
    %c0_i32 = arith.constant 0 : i32
    %c0_i32_0 = arith.constant 0 : i32
    return %arg0, %c0_i32 : i32, i32
  }
  func.func @transform_21(%arg0: i32) -> (i32, i32) {
    %c0_i32 = arith.constant 0 : i32
    %c0_i32_0 = arith.constant 0 : i32
    return %arg0, %c0_i32 : i32, i32
  }
}

</mosaic_0001>

<llo_original>
// kernel: emotional_encoding_forward.1
$region0: #{emotional_encoding_forward.1}
  #allocation0 [shape = 'u32[]', space=smem, size = 0x4, offset = 0x4, fixed_abs, tag = 'smem constant byte address 0x4 - core index']
  #allocation1 [shape = 'u32[144,128]{1,0:T(1,128)}', space=vmem, size = 0x12000, scoped, tag = 'internal scratch']
  #allocation2 [shape = 'f32[1,1]{1,0:T(1,128)S(1)}', space=vmem, size = 0x200, scoped, tag = 'scoped memory for emotional_encoding_forward.1']
  %s0 = inlined_call_operand.vmem [shape: f32[8,256], index: 0, kind: input, shape index: {}]
  %s1 = inlined_call_operand.vmem [shape: f32[8,32], index: 1, kind: input, shape index: {}]
  %s2 = inlined_call_operand.vmem [shape: bf16[32,128], index: 2, kind: input, shape index: {}]
  %s3 = inlined_call_operand.vmem [shape: f32[1,128], index: 3, kind: input, shape index: {}]
  %s4 = inlined_call_operand.hbm [shape: bf16[128,128], index: 4, kind: input, shape index: {}]
  %s5 = inlined_call_operand.hbm [shape: f32[1,128], index: 5, kind: input, shape index: {}]
  %s6 = inlined_call_operand.hbm [shape: bf16[256,256], index: 6, kind: input, shape index: {}]
  %s7 = inlined_call_operand.hbm [shape: f32[1,256], index: 7, kind: input, shape index: {}]
  %s8 = inlined_call_operand.hbm [shape: bf16[256,128], index: 8, kind: input, shape index: {}]
  %s9 = inlined_call_operand.hbm [shape: f32[1,128], index: 9, kind: input, shape index: {}]
  %s10 = inlined_call_operand.hbm [shape: bf16[128,256], index: 10, kind: input, shape index: {}]
  %s11 = inlined_call_operand.hbm [shape: bf16[128,256], index: 11, kind: input, shape index: {}]
  %s12 = inlined_call_operand.hbm [shape: f32[1,256], index: 12, kind: input, shape index: {}]
  %s13 = inlined_call_operand.hbm [shape: bf16[256,256], index: 13, kind: input, shape index: {}]
  %s14 = inlined_call_operand.hbm [shape: f32[1,256], index: 14, kind: input, shape index: {}]
  %s15 = inlined_call_operand.hbm [shape: bf16[256,128], index: 15, kind: input, shape index: {}]
  %s16 = inlined_call_operand.hbm [shape: bf16[128,128], index: 16, kind: input, shape index: {}]
  %s17 = inlined_call_operand.hbm [shape: f32[1,128], index: 17, kind: input, shape index: {}]
  %s18 = inlined_call_operand.vmem [shape: bf16[1,128], index: 18, kind: input, shape index: {}]
  %s19 = inlined_call_operand.<no memory space> [shape: f32[1,1], index: 19, kind: input, shape index: {}]
  %s20 = inlined_call_operand.hbm [shape: f32[8,256], index: 20, kind: output, shape index: {0}]
  %s21 = inlined_call_operand.vmem [shape: f32[8,1], index: 21, kind: output, shape index: {1}]
  %22 = xla_tuple %s20, %s21
  %s23 = sld [smem:[#allocation0]]
  $region154: #{emotional_encoding_forward.1} parent=0
    _
  %s25 = ssub.s32 1, %s23
  %s26 = scalar_select 0, %s25, %s23
  %v27 = vstv %s19
  %28 = vst [vmem:[#allocation2] sm:$0x1] %v27
  $region1: #{emotional_encoding_forward.1} parent=0
    #allocation3 [shape = 'u8[32768]{0}', space=vmem, size = 0x8000, scoped, tag = 'input window, operand 4, single buffered']
    #allocation4 [shape = 's32[1]{0}', space=sflag, size = 0x4, scoped, tag = 'scoped memory for emotional_encoding_forward.1']
    #allocation5 [shape = 's32[1]{0}', space=sflag, size = 0x4, scoped, tag = 'scoped memory for emotional_encoding_forward.1']
    #allocation6 [shape = 'u8[512]{0}', space=vmem, size = 0x400, scoped, tag = 'input window, operand 5, single buffered']
    #allocation7 [shape = 's32[1]{0}', space=sflag, size = 0x4, scoped, tag = 'scoped memory for emotional_encoding_forward.1']
    #allocation8 [shape = 'u8[131072]{0}', space=vmem, size = 0x20000, scoped, tag = 'input window, operand 6, single buffered']
    #allocation9 [shape = 'u8[1024]{0}', space=vmem, size = 0x400, scoped, tag = 'input window, operand 7, single buffered']
    #allocation10 [shape = 's32[1]{0}', space=sflag, size = 0x4, scoped, tag = 'scoped memory for emotional_encoding_forward.1']
    #allocation11 [shape = 'u8[65536]{0}', space=vmem, size = 0x10000, scoped, tag = 'input window, operand 8, single buffered']
    #allocation12 [shape = 'u8[512]{0}', space=vmem, size = 0x400, scoped, tag = 'input window, operand 9, single buffered']
    #allocation13 [shape = 's32[1]{0}', space=sflag, size = 0x4, scoped, tag = 'scoped memory for emotional_encoding_forward.1']
    #allocation14 [shape = 'u8[65536]{0}', space=vmem, size = 0x10000, scoped, tag = 'input window, operand 10, single buffered']
    #allocation15 [shape = 'u8[65536]{0}', space=vmem, size = 0x10000, scoped, tag = 'input window, operand 11, single buffered']
    #allocation16 [shape = 's32[1]{0}', space=sflag, size = 0x4, scoped, tag = 'scoped memory for emotional_encoding_forward.1']
    #allocation17 [shape = 'u8[1024]{0}', space=vmem, size = 0x400, scoped, tag = 'input window, operand 12, single buffered']
    #allocation18 [shape = 'u8[131072]{0}', space=vmem, size = 0x20000, scoped, tag = 'input window, operand 13, single buffered']
    #allocation19 [shape = 's32[1]{0}', space=sflag, size = 0x4, scoped, tag = 'scoped memory for emotional_encoding_forward.1']
    #allocation20 [shape = 'u8[1024]{0}', space=vmem, size = 0x400, scoped, tag = 'input window, operand 14, single buffered']
    #allocation21 [shape = 'u8[65536]{0}', space=vmem, size = 0x10000, scoped, tag = 'input window, operand 15, single buffered']
    #allocation22 [shape = 's32[1]{0}', space=sflag, size = 0x4, scoped, tag = 'scoped memory for emotional_encoding_forward.1']
    #allocation23 [shape = 'u8[32768]{0}', space=vmem, size = 0x8000, scoped, tag = 'input window, operand 16, single buffered']
    #allocation24 [shape = 'u8[512]{0}', space=vmem, size = 0x400, scoped, tag = 'input window, operand 17, single buffered']
    #allocation25 [shape = 's32[1]{0}', space=sflag, size = 0x4, scoped, tag = 'scoped memory for emotional_encoding_forward.1']
    #allocation26 [shape = 'u8[8192]{0}', space=vmem, size = 0x2000, scoped, tag = 'output window, operand 0, single buffered']
    %29 = vsyncpa [#allocation4], 0
    %30 = vsyncpa [#allocation7], 0
    %31 = vsyncpa [#allocation10], 0
    %32 = vsyncpa [#allocation13], 0
    %33 = vsyncpa [#allocation16], 0
    %34 = vsyncpa [#allocation19], 0
    %35 = vsyncpa [#allocation22], 0
    %36 = vsyncpa [#allocation25], 0
    %37 = vsyncpa [#allocation5], 0
    // Predicated region
    $region2: #{emotional_encoding_forward.1} parent=1 // pred_check
      _
    $region3: #{emotional_encoding_forward.1} parent=1 // pred_check_branch
      %39 = sbr.rel (0) target = $region5
    $region4: #{emotional_encoding_forward.1} parent=1 // pred_region
      _
    $region5: #{emotional_encoding_forward.1} parent=1 // pred_fallthru
      _
    // Predicated region
    $region6: #{emotional_encoding_forward.1} parent=1 // pred_check
      _
    $region7: #{emotional_encoding_forward.1} parent=1 // pred_check_branch
      %41 = sbr.rel (0) target = $region9
    $region8: #{emotional_encoding_forward.1} parent=1 // pred_region
      _
    $region9: #{emotional_encoding_forward.1} parent=1 // pred_fallthru
      _
    // Predicated region
    $region10: #{emotional_encoding_forward.1} parent=1 // pred_check
      _
    $region11: #{emotional_encoding_forward.1} parent=1 // pred_check_branch
      %43 = sbr.rel (0) target = $region13
    $region12: #{emotional_encoding_forward.1} parent=1 // pred_region
      _
    $region13: #{emotional_encoding_forward.1} parent=1 // pred_fallthru
      _
    // Predicated region
    $region14: #{emotional_encoding_forward.1} parent=1 // pred_check
      _
    $region15: #{emotional_encoding_forward.1} parent=1 // pred_check_branch
      %45 = sbr.rel (0) target = $region17
    $region16: #{emotional_encoding_forward.1} parent=1 // pred_region
      _
    $region17: #{emotional_encoding_forward.1} parent=1 // pred_fallthru
      _
    // Predicated region
    $region18: #{emotional_encoding_forward.1} parent=1 // pred_check
      _
    $region19: #{emotional_encoding_forward.1} parent=1 // pred_check_branch
      %47 = sbr.rel (0) target = $region21
    $region20: #{emotional_encoding_forward.1} parent=1 // pred_region
      %s49 = ssub.s32 1024, 1024
      %50 = vsyncadd [#allocation4], %s49
      %s51 = sshll.u32 [#allocation3], 4
      %s52 = int_to_ptr.vmem [resolvable:$true] %s51
      %57 = dma.hbm_to_vmem [thread:$0]  %s4, 1024, %s52, [#allocation4], 64, 64, 4
    $region21: #{emotional_encoding_forward.1} parent=1 // pred_fallthru
      _
    // Predicated region
    $region22: #{emotional_encoding_forward.1} parent=1 // pred_check
      _
    $region23: #{emotional_encoding_forward.1} parent=1 // pred_check_branch
      %59 = sbr.rel (0) target = $region25
    $region24: #{emotional_encoding_forward.1} parent=1 // pred_region
      %s61 = ssub.s32 16, 16
      %62 = vsyncadd [#allocation7], %s61
      %s64 = sshll.u32 [#allocation6], 4
      %s65 = int_to_ptr.vmem [resolvable:$true] %s64
      %67 = dma.hbm_to_vmem [thread:$0]  %s5, 16, %s65, [#allocation7]
    $region25: #{emotional_encoding_forward.1} parent=1 // pred_fallthru
      _
    // Predicated region
    $region26: #{emotional_encoding_forward.1} parent=1 // pred_check
      _
    $region27: #{emotional_encoding_forward.1} parent=1 // pred_check_branch
      %69 = sbr.rel (0) target = $region29
    $region28: #{emotional_encoding_forward.1} parent=1 // pred_region
      %s71 = ssub.s32 4096, 4096
      %72 = vsyncadd [#allocation7], %s71
      %s73 = sshll.u32 [#allocation8], 4
      %s74 = int_to_ptr.vmem [resolvable:$true] %s73
      %79 = dma.hbm_to_vmem [thread:$0]  %s6, 4096, %s74, [#allocation7], 128, 128, 8
    $region29: #{emotional_encoding_forward.1} parent=1 // pred_fallthru
      _
    // Predicated region
    $region30: #{emotional_encoding_forward.1} parent=1 // pred_check
      _
    $region31: #{emotional_encoding_forward.1} parent=1 // pred_check_branch
      %81 = sbr.rel (0) target = $region33
    $region32: #{emotional_encoding_forward.1} parent=1 // pred_region
      %s83 = ssub.s32 32, 32
      %84 = vsyncadd [#allocation10], %s83
      %s86 = sshll.u32 [#allocation9], 4
      %s87 = int_to_ptr.vmem [resolvable:$true] %s86
      %89 = dma.hbm_to_vmem [thread:$0]  %s7, 32, %s87, [#allocation10]
    $region33: #{emotional_encoding_forward.1} parent=1 // pred_fallthru
      _
    // Predicated region
    $region34: #{emotional_encoding_forward.1} parent=1 // pred_check
      _
    $region35: #{emotional_encoding_forward.1} parent=1 // pred_check_branch
      %91 = sbr.rel (0) target = $region37
    $region36: #{emotional_encoding_forward.1} parent=1 // pred_region
      %s93 = ssub.s32 2048, 2048
      %94 = vsyncadd [#allocation10], %s93
      %s95 = sshll.u32 [#allocation11], 4
      %s96 = int_to_ptr.vmem [resolvable:$true] %s95
      %101 = dma.hbm_to_vmem [thread:$0]  %s8, 2048, %s96, [#allocation10], 64, 64, 4
    $region37: #{emotional_encoding_forward.1} parent=1 // pred_fallthru
      _
    // Predicated region
    $region38: #{emotional_encoding_forward.1} parent=1 // pred_check
      _
    $region39: #{emotional_encoding_forward.1} parent=1 // pred_check_branch
      %103 = sbr.rel (0) target = $region41
    $region40: #{emotional_encoding_forward.1} parent=1 // pred_region
      %s105 = ssub.s32 16, 16
      %106 = vsyncadd [#allocation13], %s105
      %s108 = sshll.u32 [#allocation12], 4
      %s109 = int_to_ptr.vmem [resolvable:$true] %s108
      %111 = dma.hbm_to_vmem [thread:$0]  %s9, 16, %s109, [#allocation13]
    $region41: #{emotional_encoding_forward.1} parent=1 // pred_fallthru
      _
    // Predicated region
    $region42: #{emotional_encoding_forward.1} parent=1 // pred_check
      _
    $region43: #{emotional_encoding_forward.1} parent=1 // pred_check_branch
      %113 = sbr.rel (0) target = $region45
    $region44: #{emotional_encoding_forward.1} parent=1 // pred_region
      %s115 = ssub.s32 2048, 2048
      %116 = vsyncadd [#allocation13], %s115
      %s117 = sshll.u32 [#allocation14], 4
      %s118 = int_to_ptr.vmem [resolvable:$true] %s117
      %123 = dma.hbm_to_vmem [thread:$0]  %s10, 2048, %s118, [#allocation13], 128, 128, 8
    $region45: #{emotional_encoding_forward.1} parent=1 // pred_fallthru
      _
    // Predicated region
    $region46: #{emotional_encoding_forward.1} parent=1 // pred_check
      _
    $region47: #{emotional_encoding_forward.1} parent=1 // pred_check_branch
      %125 = sbr.rel (0) target = $region49
    $region48: #{emotional_encoding_forward.1} parent=1 // pred_region
      %s127 = ssub.s32 2048, 2048
      %128 = vsyncadd [#allocation16], %s127
      %s129 = sshll.u32 [#allocation15], 4
      %s130 = int_to_ptr.vmem [resolvable:$true] %s129
      %135 = dma.hbm_to_vmem [thread:$0]  %s11, 2048, %s130, [#allocation16], 128, 128, 8
    $region49: #{emotional_encoding_forward.1} parent=1 // pred_fallthru
      _
    // Predicated region
    $region50: #{emotional_encoding_forward.1} parent=1 // pred_check
      _
    $region51: #{emotional_encoding_forward.1} parent=1 // pred_check_branch
      %137 = sbr.rel (0) target = $region53
    $region52: #{emotional_encoding_forward.1} parent=1 // pred_region
      %s139 = ssub.s32 32, 32
      %140 = vsyncadd [#allocation16], %s139
      %s142 = sshll.u32 [#allocation17], 4
      %s143 = int_to_ptr.vmem [resolvable:$true] %s142
      %145 = dma.hbm_to_vmem [thread:$0]  %s12, 32, %s143, [#allocation16]
    $region53: #{emotional_encoding_forward.1} parent=1 // pred_fallthru
      _
    // Predicated region
    $region54: #{emotional_encoding_forward.1} parent=1 // pred_check
      _
    $region55: #{emotional_encoding_forward.1} parent=1 // pred_check_branch
      %147 = sbr.rel (0) target = $region57
    $region56: #{emotional_encoding_forward.1} parent=1 // pred_region
      %s149 = ssub.s32 4096, 4096
      %150 = vsyncadd [#allocation19], %s149
      %s151 = sshll.u32 [#allocation18], 4
      %s152 = int_to_ptr.vmem [resolvable:$true] %s151
      %157 = dma.hbm_to_vmem [thread:$0]  %s13, 4096, %s152, [#allocation19], 128, 128, 8
    $region57: #{emotional_encoding_forward.1} parent=1 // pred_fallthru
      _
    // Predicated region
    $region58: #{emotional_encoding_forward.1} parent=1 // pred_check
      _
    $region59: #{emotional_encoding_forward.1} parent=1 // pred_check_branch
      %159 = sbr.rel (0) target = $region61
    $region60: #{emotional_encoding_forward.1} parent=1 // pred_region
      %s161 = ssub.s32 32, 32
      %162 = vsyncadd [#allocation19], %s161
      %s164 = sshll.u32 [#allocation20], 4
      %s165 = int_to_ptr.vmem [resolvable:$true] %s164
      %167 = dma.hbm_to_vmem [thread:$0]  %s14, 32, %s165, [#allocation19]
    $region61: #{emotional_encoding_forward.1} parent=1 // pred_fallthru
      _
    // Predicated region
    $region62: #{emotional_encoding_forward.1} parent=1 // pred_check
      _
    $region63: #{emotional_encoding_forward.1} parent=1 // pred_check_branch
      %169 = sbr.rel (0) target = $region65
    $region64: #{emotional_encoding_forward.1} parent=1 // pred_region
      %s171 = ssub.s32 2048, 2048
      %172 = vsyncadd [#allocation22], %s171
      %s173 = sshll.u32 [#allocation21], 4
      %s174 = int_to_ptr.vmem [resolvable:$true] %s173
      %179 = dma.hbm_to_vmem [thread:$0]  %s15, 2048, %s174, [#allocation22], 64, 64, 4
    $region65: #{emotional_encoding_forward.1} parent=1 // pred_fallthru
      _
    // Predicated region
    $region66: #{emotional_encoding_forward.1} parent=1 // pred_check
      _
    $region67: #{emotional_encoding_forward.1} parent=1 // pred_check_branch
      %181 = sbr.rel (0) target = $region69
    $region68: #{emotional_encoding_forward.1} parent=1 // pred_region
      %s183 = ssub.s32 1024, 1024
      %184 = vsyncadd [#allocation22], %s183
      %s185 = sshll.u32 [#allocation23], 4
      %s186 = int_to_ptr.vmem [resolvable:$true] %s185
      %191 = dma.hbm_to_vmem [thread:$0]  %s16, 1024, %s186, [#allocation22], 64, 64, 4
    $region69: #{emotional_encoding_forward.1} parent=1 // pred_fallthru
      _
    // Predicated region
    $region70: #{emotional_encoding_forward.1} parent=1 // pred_check
      _
    $region71: #{emotional_encoding_forward.1} parent=1 // pred_check_branch
      %193 = sbr.rel (0) target = $region73
    $region72: #{emotional_encoding_forward.1} parent=1 // pred_region
      %s195 = ssub.s32 16, 16
      %196 = vsyncadd [#allocation25], %s195
      %s198 = sshll.u32 [#allocation24], 4
      %s199 = int_to_ptr.vmem [resolvable:$true] %s198
      %201 = dma.hbm_to_vmem [thread:$0]  %s17, 16, %s199, [#allocation25]
    $region73: #{emotional_encoding_forward.1} parent=1 // pred_fallthru
      _
    // Predicated region
    $region74: #{emotional_encoding_forward.1} parent=1 // pred_check
      _
    $region75: #{emotional_encoding_forward.1} parent=1 // pred_check_branch
      %203 = sbr.rel (0) target = $region77
    $region76: #{emotional_encoding_forward.1} parent=1 // pred_region
      _
    $region77: #{emotional_encoding_forward.1} parent=1 // pred_fallthru
      _
    // Predicated region
    $region78: #{emotional_encoding_forward.1} parent=1 // pred_check
      _
    $region79: #{emotional_encoding_forward.1} parent=1 // pred_check_branch
      %205 = sbr.rel (0) target = $region81
    $region80: #{emotional_encoding_forward.1} parent=1 // pred_region
      _
    $region81: #{emotional_encoding_forward.1} parent=1 // pred_fallthru
      _
    // Predicated region
    $region82: #{emotional_encoding_forward.1} parent=1 // pred_check
      _
    $region83: #{emotional_encoding_forward.1} parent=1 // pred_check_branch
      %207 = sbr.rel (0) target = $region85
    $region84: #{emotional_encoding_forward.1} parent=1 // pred_region
      %208 = dma.done [#allocation4], 1024
    $region85: #{emotional_encoding_forward.1} parent=1 // pred_fallthru
      _
    // Predicated region
    $region86: #{emotional_encoding_forward.1} parent=1 // pred_check
      _
    $region87: #{emotional_encoding_forward.1} parent=1 // pred_check_branch
      %210 = sbr.rel (0) target = $region89
    $region88: #{emotional_encoding_forward.1} parent=1 // pred_region
      %211 = dma.done [#allocation7], 16
    $region89: #{emotional_encoding_forward.1} parent=1 // pred_fallthru
      _
    // Predicated region
    $region90: #{emotional_encoding_forward.1} parent=1 // pred_check
      _
    $region91: #{emotional_encoding_forward.1} parent=1 // pred_check_branch
      %213 = sbr.rel (0) target = $region93
    $region92: #{emotional_encoding_forward.1} parent=1 // pred_region
      %214 = dma.done [#allocation7], 4096
    $region93: #{emotional_encoding_forward.1} parent=1 // pred_fallthru
      _
    // Predicated region
    $region94: #{emotional_encoding_forward.1} parent=1 // pred_check
      _
    $region95: #{emotional_encoding_forward.1} parent=1 // pred_check_branch
      %216 = sbr.rel (0) target = $region97
    $region96: #{emotional_encoding_forward.1} parent=1 // pred_region
      %217 = dma.done [#allocation10], 32
    $region97: #{emotional_encoding_forward.1} parent=1 // pred_fallthru
      _
    // Predicated region
    $region98: #{emotional_encoding_forward.1} parent=1 // pred_check
      _
    $region99: #{emotional_encoding_forward.1} parent=1 // pred_check_branch
      %219 = sbr.rel (0) target = $region101
    $region100: #{emotional_encoding_forward.1} parent=1 // pred_region
      %220 = dma.done [#allocation10], 2048
    $region101: #{emotional_encoding_forward.1} parent=1 // pred_fallthru
      _
    // Predicated region
    $region102: #{emotional_encoding_forward.1} parent=1 // pred_check
      _
    $region103: #{emotional_encoding_forward.1} parent=1 // pred_check_branch
      %222 = sbr.rel (0) target = $region105
    $region104: #{emotional_encoding_forward.1} parent=1 // pred_region
      %223 = dma.done [#allocation13], 16
    $region105: #{emotional_encoding_forward.1} parent=1 // pred_fallthru
      _
    // Predicated region
    $region106: #{emotional_encoding_forward.1} parent=1 // pred_check
      _
    $region107: #{emotional_encoding_forward.1} parent=1 // pred_check_branch
      %225 = sbr.rel (0) target = $region109
    $region108: #{emotional_encoding_forward.1} parent=1 // pred_region
      %226 = dma.done [#allocation13], 2048
    $region109: #{emotional_encoding_forward.1} parent=1 // pred_fallthru
      _
    // Predicated region
    $region110: #{emotional_encoding_forward.1} parent=1 // pred_check
      _
    $region111: #{emotional_encoding_forward.1} parent=1 // pred_check_branch
      %228 = sbr.rel (0) target = $region113
    $region112: #{emotional_encoding_forward.1} parent=1 // pred_region
      %229 = dma.done [#allocation16], 2048
    $region113: #{emotional_encoding_forward.1} parent=1 // pred_fallthru
      _
    // Predicated region
    $region114: #{emotional_encoding_forward.1} parent=1 // pred_check
      _
    $region115: #{emotional_encoding_forward.1} parent=1 // pred_check_branch
      %231 = sbr.rel (0) target = $region117
    $region116: #{emotional_encoding_forward.1} parent=1 // pred_region
      %232 = dma.done [#allocation16], 32
    $region117: #{emotional_encoding_forward.1} parent=1 // pred_fallthru
      _
    // Predicated region
    $region118: #{emotional_encoding_forward.1} parent=1 // pred_check
      _
    $region119: #{emotional_encoding_forward.1} parent=1 // pred_check_branch
      %234 = sbr.rel (0) target = $region121
    $region120: #{emotional_encoding_forward.1} parent=1 // pred_region
      %235 = dma.done [#allocation19], 4096
    $region121: #{emotional_encoding_forward.1} parent=1 // pred_fallthru
      _
    // Predicated region
    $region122: #{emotional_encoding_forward.1} parent=1 // pred_check
      _
    $region123: #{emotional_encoding_forward.1} parent=1 // pred_check_branch
      %237 = sbr.rel (0) target = $region125
    $region124: #{emotional_encoding_forward.1} parent=1 // pred_region
      %238 = dma.done [#allocation19], 32
    $region125: #{emotional_encoding_forward.1} parent=1 // pred_fallthru
      _
    // Predicated region
    $region126: #{emotional_encoding_forward.1} parent=1 // pred_check
      _
    $region127: #{emotional_encoding_forward.1} parent=1 // pred_check_branch
      %240 = sbr.rel (0) target = $region129
    $region128: #{emotional_encoding_forward.1} parent=1 // pred_region
      %241 = dma.done [#allocation22], 2048
    $region129: #{emotional_encoding_forward.1} parent=1 // pred_fallthru
      _
    // Predicated region
    $region130: #{emotional_encoding_forward.1} parent=1 // pred_check
      _
    $region131: #{emotional_encoding_forward.1} parent=1 // pred_check_branch
      %243 = sbr.rel (0) target = $region133
    $region132: #{emotional_encoding_forward.1} parent=1 // pred_region
      %244 = dma.done [#allocation22], 1024
    $region133: #{emotional_encoding_forward.1} parent=1 // pred_fallthru
      _
    // Predicated region
    $region134: #{emotional_encoding_forward.1} parent=1 // pred_check
      _
    $region135: #{emotional_encoding_forward.1} parent=1 // pred_check_branch
      %246 = sbr.rel (0) target = $region137
    $region136: #{emotional_encoding_forward.1} parent=1 // pred_region
      %247 = dma.done [#allocation25], 16
    $region137: #{emotional_encoding_forward.1} parent=1 // pred_fallthru
      _
    %v249 = vld [vmem:[%s0] sm:$0xff]
    %v250 = vld [vmem:[%s0 + $0x8] sm:$0xff]
    %v251 = vld [vmem:[%s1] sm:$0xff]
    %v252 = vpack.c.bf16 %v251, %v251
    %v253 = vld [vmem:[%s2] sm:$0xf]
    %v254 = vld [vmem:[%s2 + $0x4] sm:$0xf]
    %v255 = vld [vmem:[%s2 + $0x8] sm:$0xf]
    %v256 = vld [vmem:[%s2 + $0xc] sm:$0xf]
    %v257 = vld [vmem:[%s3] sm:$0x1]
    %v259 = vlaneseq
    %v260 = vshrl.u32 %v259, 7
    %v261 = vsub.s32 0, %v260
    %v262 = vrot.slane %v257, %v261
    %v268 = vunpack.c.l.b16 %v253
    %v269 = vunpack.c.l.b16 %v254
    %v270 = vunpack.c.l.b16 %v255
    %v271 = vunpack.c.l.b16 %v256
    %v272 = vpack.c.b16 %v269, %v268
    %v273 = vpack.c.b16 %v271, %v270
    %vm276 = vcmask 261120
    %v278 = vsel %vm276, %v252, 0
    %280 = vmatprep.subr.bf16.mxu0 0
    %281 = vmatpush1.bf16.msra.mxu0 0
    %282 = vmatprep.subr.bf16.mxu0 0
    %283 = vmatpush1.bf16.msra.mxu0 0
    %284 = vmatprep.subr.bf16.mxu0 0
    %285 = vmatpush1.bf16.msra.mxu0 0
    %286 = vmatprep.subr.bf16.mxu0 0
    %287 = vmatpush1.bf16.msra.mxu0 0
    %288 = vmatprep.subr.bf16.mxu0 0
    %289 = vmatpush1.bf16.msra.mxu0 0
    %290 = vmatprep.subr.bf16.mxu0 0
    %291 = vmatpush1.bf16.msra.mxu0 0
    %292 = vmatprep.subr.bf16.mxu0 0
    %293 = vmatpush1.bf16.msra.mxu0 %v273
    %294 = vmatprep.subr.bf16.mxu0 0
    %295 = vmatpush1.bf16.msra.mxu0 %v272
    %296 = vmatprep.subr.bf16.mxu0 0
    %297 = vmatpush2.bf16.msra.mxu0 0
    %298 = vmatprep.subr.bf16.mxu0 0
    %299 = vmatpush2.bf16.msra.mxu0 0
    %300 = vmatprep.subr.bf16.mxu0 0
    %301 = vmatpush2.bf16.msra.mxu0 0
    %302 = vmatprep.subr.bf16.mxu0 0
    %303 = vmatpush2.bf16.msra.mxu0 0
    %304 = vmatprep.subr.bf16.mxu0 0
    %305 = vmatpush2.bf16.msra.mxu0 0
    %306 = vmatprep.subr.bf16.mxu0 0
    %307 = vmatpush2.bf16.msra.mxu0 0
    %308 = vmatprep.subr.bf16.mxu0 0
    %309 = vmatpush2.bf16.msra.mxu0 0
    %310 = vmatprep.subr.bf16.mxu0 0
    %311 = vmatpush2.bf16.msra.mxu0 0
    %312 = vmatprep.mubr.bf16.mxu0 0
    %313 = vmatmul.mubr.bf16.gmra.mxu0 %v278
    %v314 = vpop.f32.mrf.mxu0
    %v315 = vadd.f32 %v262, %v314
    %v316 = vpop.f32.mrf.mxu0
    %v317 = vpop.f32.mrf.mxu0
    %v318 = vpop.f32.mrf.mxu0
    %319 = vdwg.mxu0
    %v320 = vmax.f32 %v315, 0.0
    %v321 = vpack.c.bf16 %v320, %v320
    %v322 = vld [vmem:[#allocation3] sm:$0xf]
    %v323 = vld [vmem:[#allocation3 + $0x4] sm:$0xf]
    %v324 = vld [vmem:[#allocation3 + $0x8] sm:$0xf]
    %v325 = vld [vmem:[#allocation3 + $0xc] sm:$0xf]
    %v326 = vld [vmem:[#allocation3 + $0x10] sm:$0xf]
    %v327 = vld [vmem:[#allocation3 + $0x14] sm:$0xf]
    %v328 = vld [vmem:[#allocation3 + $0x18] sm:$0xf]
    %v329 = vld [vmem:[#allocation3 + $0x1c] sm:$0xf]
    %v330 = vld [vmem:[#allocation3 + $0x20] sm:$0xf]
    %v331 = vld [vmem:[#allocation3 + $0x24] sm:$0xf]
    %v332 = vld [vmem:[#allocation3 + $0x28] sm:$0xf]
    %v333 = vld [vmem:[#allocation3 + $0x2c] sm:$0xf]
    %v334 = vld [vmem:[#allocation3 + $0x30] sm:$0xf]
    %v335 = vld [vmem:[#allocation3 + $0x34] sm:$0xf]
    %v336 = vld [vmem:[#allocation3 + $0x38] sm:$0xf]
    %v337 = vld [vmem:[#allocation3 + $0x3c] sm:$0xf]
    %v338 = vld [vmem:[#allocation6] sm:$0x1]
    %v340 = vlaneseq
    %v341 = vshrl.u32 %v340, 7
    %v342 = vsub.s32 0, %v341
    %v343 = vrot.slane %v338, %v342
    %v361 = vunpack.c.l.b16 %v322
    %v362 = vunpack.c.l.b16 %v323
    %v363 = vunpack.c.l.b16 %v324
    %v364 = vunpack.c.l.b16 %v325
    %v365 = vunpack.c.l.b16 %v326
    %v366 = vunpack.c.l.b16 %v327
    %v367 = vunpack.c.l.b16 %v328
    %v368 = vunpack.c.l.b16 %v329
    %v369 = vunpack.c.l.b16 %v330
    %v370 = vunpack.c.l.b16 %v331
    %v371 = vunpack.c.l.b16 %v332
    %v372 = vunpack.c.l.b16 %v333
    %v373 = vunpack.c.l.b16 %v334
    %v374 = vunpack.c.l.b16 %v335
    %v375 = vunpack.c.l.b16 %v336
    %v376 = vunpack.c.l.b16 %v337
    %v377 = vpack.c.b16 %v362, %v361
    %v378 = vpack.c.b16 %v364, %v363
    %v379 = vpack.c.b16 %v366, %v365
    %v380 = vpack.c.b16 %v368, %v367
    %v381 = vpack.c.b16 %v370, %v369
    %v382 = vpack.c.b16 %v372, %v371
    %v383 = vpack.c.b16 %v374, %v373
    %v384 = vpack.c.b16 %v376, %v375
    %393 = vmatprep.subr.bf16.mxu0 0
    %394 = vmatpush1.bf16.msra.mxu0 %v384
    %395 = vmatprep.subr.bf16.mxu0 0
    %396 = vmatpush1.bf16.msra.mxu0 %v383
    %397 = vmatprep.subr.bf16.mxu0 0
    %398 = vmatpush1.bf16.msra.mxu0 %v382
    %399 = vmatprep.subr.bf16.mxu0 0
    %400 = vmatpush1.bf16.msra.mxu0 %v381
    %401 = vmatprep.subr.bf16.mxu0 0
    %402 = vmatpush1.bf16.msra.mxu0 %v380
    %403 = vmatprep.subr.bf16.mxu0 0
    %404 = vmatpush1.bf16.msra.mxu0 %v379
    %405 = vmatprep.subr.bf16.mxu0 0
    %406 = vmatpush1.bf16.msra.mxu0 %v378
    %407 = vmatprep.subr.bf16.mxu0 0
    %408 = vmatpush1.bf16.msra.mxu0 %v377
    %409 = vmatprep.subr.bf16.mxu0 0
    %410 = vmatpush2.bf16.msra.mxu0 0
    %411 = vmatprep.subr.bf16.mxu0 0
    %412 = vmatpush2.bf16.msra.mxu0 0
    %413 = vmatprep.subr.bf16.mxu0 0
    %414 = vmatpush2.bf16.msra.mxu0 0
    %415 = vmatprep.subr.bf16.mxu0 0
    %416 = vmatpush2.bf16.msra.mxu0 0
    %417 = vmatprep.subr.bf16.mxu0 0
    %418 = vmatpush2.bf16.msra.mxu0 0
    %419 = vmatprep.subr.bf16.mxu0 0
    %420 = vmatpush2.bf16.msra.mxu0 0
    %421 = vmatprep.subr.bf16.mxu0 0
    %422 = vmatpush2.bf16.msra.mxu0 0
    %423 = vmatprep.subr.bf16.mxu0 0
    %424 = vmatpush2.bf16.msra.mxu0 0
    %425 = vmatprep.mubr.bf16.mxu0 0
    %426 = vmatmul.mubr.bf16.gmra.mxu0 %v321
    %v427 = vpop.f32.mrf.mxu0
    %v428 = vadd.f32 %v343, %v427
    %v429 = vpop.f32.mrf.mxu0
    %v430 = vpop.f32.mrf.mxu0
    %v431 = vpop.f32.mrf.mxu0
    %432 = vdwg.mxu0
    %v433 = vpack.c.bf16 %v249, %v249
    %v434 = vpack.c.bf16 %v250, %v250
    %v435 = vld [vmem:[#allocation8] sm:$0xff]
    %v436 = vld [vmem:[#allocation8 + $0x8] sm:$0xff]
    %v437 = vld [vmem:[#allocation8 + $0x10] sm:$0xff]
    %v438 = vld [vmem:[#allocation8 + $0x18] sm:$0xff]
    %v439 = vld [vmem:[#allocation8 + $0x20] sm:$0xff]
    %v440 = vld [vmem:[#allocation8 + $0x28] sm:$0xff]
    %v441 = vld [vmem:[#allocation8 + $0x30] sm:$0xff]
    %v442 = vld [vmem:[#allocation8 + $0x38] sm:$0xff]
    %v443 = vld [vmem:[#allocation8 + $0x40] sm:$0xff]
    %v444 = vld [vmem:[#allocation8 + $0x48] sm:$0xff]
    %v445 = vld [vmem:[#allocation8 + $0x50] sm:$0xff]
    %v446 = vld [vmem:[#allocation8 + $0x58] sm:$0xff]
    %v447 = vld [vmem:[#allocation8 + $0x60] sm:$0xff]
    %v448 = vld [vmem:[#allocation8 + $0x68] sm:$0xff]
    %v449 = vld [vmem:[#allocation8 + $0x70] sm:$0xff]
    %v450 = vld [vmem:[#allocation8 + $0x78] sm:$0xff]
    %v451 = vld [vmem:[#allocation8 + $0x80] sm:$0xff]
    %v452 = vld [vmem:[#allocation8 + $0x88] sm:$0xff]
    %v453 = vld [vmem:[#allocation8 + $0x90] sm:$0xff]
    %v454 = vld [vmem:[#allocation8 + $0x98] sm:$0xff]
    %v455 = vld [vmem:[#allocation8 + $0xa0] sm:$0xff]
    %v456 = vld [vmem:[#allocation8 + $0xa8] sm:$0xff]
    %v457 = vld [vmem:[#allocation8 + $0xb0] sm:$0xff]
    %v458 = vld [vmem:[#allocation8 + $0xb8] sm:$0xff]
    %v459 = vld [vmem:[#allocation8 + $0xc0] sm:$0xff]
    %v460 = vld [vmem:[#allocation8 + $0xc8] sm:$0xff]
    %v461 = vld [vmem:[#allocation8 + $0xd0] sm:$0xff]
    %v462 = vld [vmem:[#allocation8 + $0xd8] sm:$0xff]
    %v463 = vld [vmem:[#allocation8 + $0xe0] sm:$0xff]
    %v464 = vld [vmem:[#allocation8 + $0xe8] sm:$0xff]
    %v465 = vld [vmem:[#allocation8 + $0xf0] sm:$0xff]
    %v466 = vld [vmem:[#allocation8 + $0xf8] sm:$0xff]
    %v467 = vld [vmem:[#allocation9] sm:$0x3]
    %v469 = vlaneseq
    %v470 = vshrl.u32 %v469, 7
    %v471 = vsub.s32 0, %v470
    %v472 = vrot.slane %v467, %v471
    %v473 = vlaneseq
    %v474 = vshrl.u32 %v473, 7
    %v475 = vsub.s32 1, %v474
    %v476 = vrot.slane %v467, %v475
    %v511 = vunpack.c.l.b16 %v435
    %v512 = vunpack.c.h.b16 %v435
    %v513 = vunpack.c.l.b16 %v436
    %v514 = vunpack.c.h.b16 %v436
    %v515 = vunpack.c.l.b16 %v437
    %v516 = vunpack.c.h.b16 %v437
    %v517 = vunpack.c.l.b16 %v438
    %v518 = vunpack.c.h.b16 %v438
    %v519 = vunpack.c.l.b16 %v439
    %v520 = vunpack.c.h.b16 %v439
    %v521 = vunpack.c.l.b16 %v440
    %v522 = vunpack.c.h.b16 %v440
    %v523 = vunpack.c.l.b16 %v441
    %v524 = vunpack.c.h.b16 %v441
    %v525 = vunpack.c.l.b16 %v442
    %v526 = vunpack.c.h.b16 %v442
    %v527 = vunpack.c.l.b16 %v443
    %v528 = vunpack.c.h.b16 %v443
    %v529 = vunpack.c.l.b16 %v444
    %v530 = vunpack.c.h.b16 %v444
    %v531 = vunpack.c.l.b16 %v445
    %v532 = vunpack.c.h.b16 %v445
    %v533 = vunpack.c.l.b16 %v446
    %v534 = vunpack.c.h.b16 %v446
    %v535 = vunpack.c.l.b16 %v447
    %v536 = vunpack.c.h.b16 %v447
    %v537 = vunpack.c.l.b16 %v448
    %v538 = vunpack.c.h.b16 %v448
    %v539 = vunpack.c.l.b16 %v449
    %v540 = vunpack.c.h.b16 %v449
    %v541 = vunpack.c.l.b16 %v450
    %v542 = vunpack.c.h.b16 %v450
    %v543 = vunpack.c.l.b16 %v451
    %v544 = vunpack.c.h.b16 %v451
    %v545 = vunpack.c.l.b16 %v452
    %v546 = vunpack.c.h.b16 %v452
    %v547 = vunpack.c.l.b16 %v453
    %v548 = vunpack.c.h.b16 %v453
    %v549 = vunpack.c.l.b16 %v454
    %v550 = vunpack.c.h.b16 %v454
    %v551 = vunpack.c.l.b16 %v455
    %v552 = vunpack.c.h.b16 %v455
    %v553 = vunpack.c.l.b16 %v456
    %v554 = vunpack.c.h.b16 %v456
    %v555 = vunpack.c.l.b16 %v457
    %v556 = vunpack.c.h.b16 %v457
    %v557 = vunpack.c.l.b16 %v458
    %v558 = vunpack.c.h.b16 %v458
    %v559 = vunpack.c.l.b16 %v459
    %v560 = vunpack.c.h.b16 %v459
    %v561 = vunpack.c.l.b16 %v460
    %v562 = vunpack.c.h.b16 %v460
    %v563 = vunpack.c.l.b16 %v461
    %v564 = vunpack.c.h.b16 %v461
    %v565 = vunpack.c.l.b16 %v462
    %v566 = vunpack.c.h.b16 %v462
    %v567 = vunpack.c.l.b16 %v463
    %v568 = vunpack.c.h.b16 %v463
    %v569 = vunpack.c.l.b16 %v464
    %v570 = vunpack.c.h.b16 %v464
    %v571 = vunpack.c.l.b16 %v465
    %v572 = vunpack.c.h.b16 %v465
    %v573 = vunpack.c.l.b16 %v466
    %v574 = vunpack.c.h.b16 %v466
    %v575 = vpack.c.b16 %v513, %v511
    %v576 = vpack.c.b16 %v514, %v512
    %v577 = vpack.c.b16 %v517, %v515
    %v578 = vpack.c.b16 %v518, %v516
    %v579 = vpack.c.b16 %v521, %v519
    %v580 = vpack.c.b16 %v522, %v520
    %v581 = vpack.c.b16 %v525, %v523
    %v582 = vpack.c.b16 %v526, %v524
    %v583 = vpack.c.b16 %v529, %v527
    %v584 = vpack.c.b16 %v530, %v528
    %v585 = vpack.c.b16 %v533, %v531
    %v586 = vpack.c.b16 %v534, %v532
    %v587 = vpack.c.b16 %v537, %v535
    %v588 = vpack.c.b16 %v538, %v536
    %v589 = vpack.c.b16 %v541, %v539
    %v590 = vpack.c.b16 %v542, %v540
    %v591 = vpack.c.b16 %v545, %v543
    %v592 = vpack.c.b16 %v546, %v544
    %v593 = vpack.c.b16 %v549, %v547
    %v594 = vpack.c.b16 %v550, %v548
    %v595 = vpack.c.b16 %v553, %v551
    %v596 = vpack.c.b16 %v554, %v552
    %v597 = vpack.c.b16 %v557, %v555
    %v598 = vpack.c.b16 %v558, %v556
    %v599 = vpack.c.b16 %v561, %v559
    %v600 = vpack.c.b16 %v562, %v560
    %v601 = vpack.c.b16 %v565, %v563
    %v602 = vpack.c.b16 %v566, %v564
    %v603 = vpack.c.b16 %v569, %v567
    %v604 = vpack.c.b16 %v570, %v568
    %v605 = vpack.c.b16 %v573, %v571
    %v606 = vpack.c.b16 %v574, %v572
    %639 = vmatprep.subr.bf16.mxu0 %v590
    %640 = vmatpush1.bf16.msra.mxu0 %v589
    %641 = vmatprep.subr.bf16.mxu0 %v588
    %642 = vmatpush1.bf16.msra.mxu0 %v587
    %643 = vmatprep.subr.bf16.mxu0 %v586
    %644 = vmatpush1.bf16.msra.mxu0 %v585
    %645 = vmatprep.subr.bf16.mxu0 %v584
    %646 = vmatpush1.bf16.msra.mxu0 %v583
    %647 = vmatprep.subr.bf16.mxu0 %v582
    %648 = vmatpush1.bf16.msra.mxu0 %v581
    %649 = vmatprep.subr.bf16.mxu0 %v580
    %650 = vmatpush1.bf16.msra.mxu0 %v579
    %651 = vmatprep.subr.bf16.mxu0 %v578
    %652 = vmatpush1.bf16.msra.mxu0 %v577
    %653 = vmatprep.subr.bf16.mxu0 %v576
    %654 = vmatpush1.bf16.msra.mxu0 %v575
    %655 = vmatprep.subr.bf16.mxu0 %v606
    %656 = vmatpush2.bf16.msra.mxu0 %v605
    %657 = vmatprep.subr.bf16.mxu0 %v604
    %658 = vmatpush2.bf16.msra.mxu0 %v603
    %659 = vmatprep.subr.bf16.mxu0 %v602
    %660 = vmatpush2.bf16.msra.mxu0 %v601
    %661 = vmatprep.subr.bf16.mxu0 %v600
    %662 = vmatpush2.bf16.msra.mxu0 %v599
    %663 = vmatprep.subr.bf16.mxu0 %v598
    %664 = vmatpush2.bf16.msra.mxu0 %v597
    %665 = vmatprep.subr.bf16.mxu0 %v596
    %666 = vmatpush2.bf16.msra.mxu0 %v595
    %667 = vmatprep.subr.bf16.mxu0 %v594
    %668 = vmatpush2.bf16.msra.mxu0 %v593
    %669 = vmatprep.subr.bf16.mxu0 %v592
    %670 = vmatpush2.bf16.msra.mxu0 %v591
    %671 = vmatprep.mubr.bf16.mxu0 %v434
    %672 = vmatmul.mubr.bf16.gmra.mxu0 %v433
    %v673 = vpop.f32.mrf.mxu0
    %v674 = vadd.f32 %v472, %v673
    %v675 = vpop.f32.mrf.mxu0
    %v676 = vadd.f32 %v476, %v675
    %v677 = vpop.f32.mrf.mxu0
    %v678 = vpop.f32.mrf.mxu0
    %679 = vdwg.mxu0
    %v680 = vmax.f32 %v674, 0.0
    %v681 = vmax.f32 %v676, 0.0
    %v682 = vpack.c.bf16 %v680, %v680
    %v683 = vpack.c.bf16 %v681, %v681
    %v684 = vld [vmem:[#allocation11] sm:$0xf]
    %v685 = vld [vmem:[#allocation11 + $0x4] sm:$0xf]
    %v686 = vld [vmem:[#allocation11 + $0x8] sm:$0xf]
    %v687 = vld [vmem:[#allocation11 + $0xc] sm:$0xf]
    %v688 = vld [vmem:[#allocation11 + $0x10] sm:$0xf]
    %v689 = vld [vmem:[#allocation11 + $0x14] sm:$0xf]
    %v690 = vld [vmem:[#allocation11 + $0x18] sm:$0xf]
    %v691 = vld [vmem:[#allocation11 + $0x1c] sm:$0xf]
    %v692 = vld [vmem:[#allocation11 + $0x20] sm:$0xf]
    %v693 = vld [vmem:[#allocation11 + $0x24] sm:$0xf]
    %v694 = vld [vmem:[#allocation11 + $0x28] sm:$0xf]
    %v695 = vld [vmem:[#allocation11 + $0x2c] sm:$0xf]
    %v696 = vld [vmem:[#allocation11 + $0x30] sm:$0xf]
    %v697 = vld [vmem:[#allocation11 + $0x34] sm:$0xf]
    %v698 = vld [vmem:[#allocation11 + $0x38] sm:$0xf]
    %v699 = vld [vmem:[#allocation11 + $0x3c] sm:$0xf]
    %v700 = vld [vmem:[#allocation11 + $0x40] sm:$0xf]
    %v701 = vld [vmem:[#allocation11 + $0x44] sm:$0xf]
    %v702 = vld [vmem:[#allocation11 + $0x48] sm:$0xf]
    %v703 = vld [vmem:[#allocation11 + $0x4c] sm:$0xf]
    %v704 = vld [vmem:[#allocation11 + $0x50] sm:$0xf]
    %v705 = vld [vmem:[#allocation11 + $0x54] sm:$0xf]
    %v706 = vld [vmem:[#allocation11 + $0x58] sm:$0xf]
    %v707 = vld [vmem:[#allocation11 + $0x5c] sm:$0xf]
    %v708 = vld [vmem:[#allocation11 + $0x60] sm:$0xf]
    %v709 = vld [vmem:[#allocation11 + $0x64] sm:$0xf]
    %v710 = vld [vmem:[#allocation11 + $0x68] sm:$0xf]
    %v711 = vld [vmem:[#allocation11 + $0x6c] sm:$0xf]
    %v712 = vld [vmem:[#allocation11 + $0x70] sm:$0xf]
    %v713 = vld [vmem:[#allocation11 + $0x74] sm:$0xf]
    %v714 = vld [vmem:[#allocation11 + $0x78] sm:$0xf]
    %v715 = vld [vmem:[#allocation11 + $0x7c] sm:$0xf]
    %v716 = vld [vmem:[#allocation12] sm:$0x1]
    %v718 = vlaneseq
    %v719 = vshrl.u32 %v718, 7
    %v720 = vsub.s32 0, %v719
    %v721 = vrot.slane %v716, %v720
    %v755 = vunpack.c.l.b16 %v684
    %v756 = vunpack.c.l.b16 %v685
    %v757 = vunpack.c.l.b16 %v686
    %v758 = vunpack.c.l.b16 %v687
    %v759 = vunpack.c.l.b16 %v688
    %v760 = vunpack.c.l.b16 %v689
    %v761 = vunpack.c.l.b16 %v690
    %v762 = vunpack.c.l.b16 %v691
    %v763 = vunpack.c.l.b16 %v692
    %v764 = vunpack.c.l.b16 %v693
    %v765 = vunpack.c.l.b16 %v694
    %v766 = vunpack.c.l.b16 %v695
    %v767 = vunpack.c.l.b16 %v696
    %v768 = vunpack.c.l.b16 %v697
    %v769 = vunpack.c.l.b16 %v698
    %v770 = vunpack.c.l.b16 %v699
    %v771 = vunpack.c.l.b16 %v700
    %v772 = vunpack.c.l.b16 %v701
    %v773 = vunpack.c.l.b16 %v702
    %v774 = vunpack.c.l.b16 %v703
    %v775 = vunpack.c.l.b16 %v704
    %v776 = vunpack.c.l.b16 %v705
    %v777 = vunpack.c.l.b16 %v706
    %v778 = vunpack.c.l.b16 %v707
    %v779 = vunpack.c.l.b16 %v708
    %v780 = vunpack.c.l.b16 %v709
    %v781 = vunpack.c.l.b16 %v710
    %v782 = vunpack.c.l.b16 %v711
    %v783 = vunpack.c.l.b16 %v712
    %v784 = vunpack.c.l.b16 %v713
    %v785 = vunpack.c.l.b16 %v714
    %v786 = vunpack.c.l.b16 %v715
    %v787 = vpack.c.b16 %v756, %v755
    %v788 = vpack.c.b16 %v758, %v757
    %v789 = vpack.c.b16 %v760, %v759
    %v790 = vpack.c.b16 %v762, %v761
    %v791 = vpack.c.b16 %v764, %v763
    %v792 = vpack.c.b16 %v766, %v765
    %v793 = vpack.c.b16 %v768, %v767
    %v794 = vpack.c.b16 %v770, %v769
    %v795 = vpack.c.b16 %v772, %v771
    %v796 = vpack.c.b16 %v774, %v773
    %v797 = vpack.c.b16 %v776, %v775
    %v798 = vpack.c.b16 %v778, %v777
    %v799 = vpack.c.b16 %v780, %v779
    %v800 = vpack.c.b16 %v782, %v781
    %v801 = vpack.c.b16 %v784, %v783
    %v802 = vpack.c.b16 %v786, %v785
    %819 = vmatprep.subr.bf16.mxu0 0
    %820 = vmatpush1.bf16.msra.mxu0 %v794
    %821 = vmatprep.subr.bf16.mxu0 0
    %822 = vmatpush1.bf16.msra.mxu0 %v793
    %823 = vmatprep.subr.bf16.mxu0 0
    %824 = vmatpush1.bf16.msra.mxu0 %v792
    %825 = vmatprep.subr.bf16.mxu0 0
    %826 = vmatpush1.bf16.msra.mxu0 %v791
    %827 = vmatprep.subr.bf16.mxu0 0
    %828 = vmatpush1.bf16.msra.mxu0 %v790
    %829 = vmatprep.subr.bf16.mxu0 0
    %830 = vmatpush1.bf16.msra.mxu0 %v789
    %831 = vmatprep.subr.bf16.mxu0 0
    %832 = vmatpush1.bf16.msra.mxu0 %v788
    %833 = vmatprep.subr.bf16.mxu0 0
    %834 = vmatpush1.bf16.msra.mxu0 %v787
    %835 = vmatprep.subr.bf16.mxu0 0
    %836 = vmatpush2.bf16.msra.mxu0 %v802
    %837 = vmatprep.subr.bf16.mxu0 0
    %838 = vmatpush2.bf16.msra.mxu0 %v801
    %839 = vmatprep.subr.bf16.mxu0 0
    %840 = vmatpush2.bf16.msra.mxu0 %v800
    %841 = vmatprep.subr.bf16.mxu0 0
    %842 = vmatpush2.bf16.msra.mxu0 %v799
    %843 = vmatprep.subr.bf16.mxu0 0
    %844 = vmatpush2.bf16.msra.mxu0 %v798
    %845 = vmatprep.subr.bf16.mxu0 0
    %846 = vmatpush2.bf16.msra.mxu0 %v797
    %847 = vmatprep.subr.bf16.mxu0 0
    %848 = vmatpush2.bf16.msra.mxu0 %v796
    %849 = vmatprep.subr.bf16.mxu0 0
    %850 = vmatpush2.bf16.msra.mxu0 %v795
    %851 = vmatprep.mubr.bf16.mxu0 %v683
    %852 = vmatmul.mubr.bf16.gmra.mxu0 %v682
    %v853 = vpop.f32.mrf.mxu0
    %v854 = vadd.f32 %v721, %v853
    %v855 = vpop.f32.mrf.mxu0
    %v856 = vpop.f32.mrf.mxu0
    %v857 = vpop.f32.mrf.mxu0
    %858 = vdwg.mxu0
    %v859 = vpack.c.bf16 %v854, %v854
    %v860 = vld [vmem:[#allocation14] sm:$0xff]
    %v861 = vld [vmem:[#allocation14 + $0x8] sm:$0xff]
    %v862 = vld [vmem:[#allocation14 + $0x10] sm:$0xff]
    %v863 = vld [vmem:[#allocation14 + $0x18] sm:$0xff]
    %v864 = vld [vmem:[#allocation14 + $0x20] sm:$0xff]
    %v865 = vld [vmem:[#allocation14 + $0x28] sm:$0xff]
    %v866 = vld [vmem:[#allocation14 + $0x30] sm:$0xff]
    %v867 = vld [vmem:[#allocation14 + $0x38] sm:$0xff]
    %v868 = vld [vmem:[#allocation14 + $0x40] sm:$0xff]
    %v869 = vld [vmem:[#allocation14 + $0x48] sm:$0xff]
    %v870 = vld [vmem:[#allocation14 + $0x50] sm:$0xff]
    %v871 = vld [vmem:[#allocation14 + $0x58] sm:$0xff]
    %v872 = vld [vmem:[#allocation14 + $0x60] sm:$0xff]
    %v873 = vld [vmem:[#allocation14 + $0x68] sm:$0xff]
    %v874 = vld [vmem:[#allocation14 + $0x70] sm:$0xff]
    %v875 = vld [vmem:[#allocation14 + $0x78] sm:$0xff]
    %v876 = vpack.c.bf16 %v428, %v428
    %v877 = vld [vmem:[#allocation15] sm:$0xff]
    %v878 = vld [vmem:[#allocation15 + $0x8] sm:$0xff]
    %v879 = vld [vmem:[#allocation15 + $0x10] sm:$0xff]
    %v880 = vld [vmem:[#allocation15 + $0x18] sm:$0xff]
    %v881 = vld [vmem:[#allocation15 + $0x20] sm:$0xff]
    %v882 = vld [vmem:[#allocation15 + $0x28] sm:$0xff]
    %v883 = vld [vmem:[#allocation15 + $0x30] sm:$0xff]
    %v884 = vld [vmem:[#allocation15 + $0x38] sm:$0xff]
    %v885 = vld [vmem:[#allocation15 + $0x40] sm:$0xff]
    %v886 = vld [vmem:[#allocation15 + $0x48] sm:$0xff]
    %v887 = vld [vmem:[#allocation15 + $0x50] sm:$0xff]
    %v888 = vld [vmem:[#allocation15 + $0x58] sm:$0xff]
    %v889 = vld [vmem:[#allocation15 + $0x60] sm:$0xff]
    %v890 = vld [vmem:[#allocation15 + $0x68] sm:$0xff]
    %v891 = vld [vmem:[#allocation15 + $0x70] sm:$0xff]
    %v892 = vld [vmem:[#allocation15 + $0x78] sm:$0xff]
    %v909 = vunpack.c.l.b16 %v877
    %v910 = vunpack.c.h.b16 %v877
    %v911 = vunpack.c.l.b16 %v878
    %v912 = vunpack.c.h.b16 %v878
    %v913 = vunpack.c.l.b16 %v879
    %v914 = vunpack.c.h.b16 %v879
    %v915 = vunpack.c.l.b16 %v880
    %v916 = vunpack.c.h.b16 %v880
    %v917 = vunpack.c.l.b16 %v881
    %v918 = vunpack.c.h.b16 %v881
    %v919 = vunpack.c.l.b16 %v882
    %v920 = vunpack.c.h.b16 %v882
    %v921 = vunpack.c.l.b16 %v883
    %v922 = vunpack.c.h.b16 %v883
    %v923 = vunpack.c.l.b16 %v884
    %v924 = vunpack.c.h.b16 %v884
    %v925 = vunpack.c.l.b16 %v885
    %v926 = vunpack.c.h.b16 %v885
    %v927 = vunpack.c.l.b16 %v886
    %v928 = vunpack.c.h.b16 %v886
    %v929 = vunpack.c.l.b16 %v887
    %v930 = vunpack.c.h.b16 %v887
    %v931 = vunpack.c.l.b16 %v888
    %v932 = vunpack.c.h.b16 %v888
    %v933 = vunpack.c.l.b16 %v889
    %v934 = vunpack.c.h.b16 %v889
    %v935 = vunpack.c.l.b16 %v890
    %v936 = vunpack.c.h.b16 %v890
    %v937 = vunpack.c.l.b16 %v891
    %v938 = vunpack.c.h.b16 %v891
    %v939 = vunpack.c.l.b16 %v892
    %v940 = vunpack.c.h.b16 %v892
    %v941 = vpack.c.b16 %v911, %v909
    %v942 = vpack.c.b16 %v912, %v910
    %v943 = vpack.c.b16 %v915, %v913
    %v944 = vpack.c.b16 %v916, %v914
    %v945 = vpack.c.b16 %v919, %v917
    %v946 = vpack.c.b16 %v920, %v918
    %v947 = vpack.c.b16 %v923, %v921
    %v948 = vpack.c.b16 %v924, %v922
    %v949 = vpack.c.b16 %v927, %v925
    %v950 = vpack.c.b16 %v928, %v926
    %v951 = vpack.c.b16 %v931, %v929
    %v952 = vpack.c.b16 %v932, %v930
    %v953 = vpack.c.b16 %v935, %v933
    %v954 = vpack.c.b16 %v936, %v934
    %v955 = vpack.c.b16 %v939, %v937
    %v956 = vpack.c.b16 %v940, %v938
    %973 = vmatprep.subr.bf16.mxu0 %v956
    %974 = vmatpush1.bf16.msra.mxu0 %v955
    %975 = vmatprep.subr.bf16.mxu0 %v954
    %976 = vmatpush1.bf16.msra.mxu0 %v953
    %977 = vmatprep.subr.bf16.mxu0 %v952
    %978 = vmatpush1.bf16.msra.mxu0 %v951
    %979 = vmatprep.subr.bf16.mxu0 %v950
    %980 = vmatpush1.bf16.msra.mxu0 %v949
    %981 = vmatprep.subr.bf16.mxu0 %v948
    %982 = vmatpush1.bf16.msra.mxu0 %v947
    %983 = vmatprep.subr.bf16.mxu0 %v946
    %984 = vmatpush1.bf16.msra.mxu0 %v945
    %985 = vmatprep.subr.bf16.mxu0 %v944
    %986 = vmatpush1.bf16.msra.mxu0 %v943
    %987 = vmatprep.subr.bf16.mxu0 %v942
    %988 = vmatpush1.bf16.msra.mxu0 %v941
    %989 = vmatprep.subr.bf16.mxu0 0
    %990 = vmatpush2.bf16.msra.mxu0 0
    %991 = vmatprep.subr.bf16.mxu0 0
    %992 = vmatpush2.bf16.msra.mxu0 0
    %993 = vmatprep.subr.bf16.mxu0 0
    %994 = vmatpush2.bf16.msra.mxu0 0
    %995 = vmatprep.subr.bf16.mxu0 0
    %996 = vmatpush2.bf16.msra.mxu0 0
    %997 = vmatprep.subr.bf16.mxu0 0
    %998 = vmatpush2.bf16.msra.mxu0 0
    %999 = vmatprep.subr.bf16.mxu0 0
    %1000 = vmatpush2.bf16.msra.mxu0 0
    %1001 = vmatprep.subr.bf16.mxu0 0
    %1002 = vmatpush2.bf16.msra.mxu0 0
    %1003 = vmatprep.subr.bf16.mxu0 0
    %1004 = vmatpush2.bf16.msra.mxu0 0
    %1005 = vmatprep.mubr.bf16.mxu0 0
    %1006 = vmatmul.mubr.bf16.gmra.mxu0 %v876
    %v1007 = vpop.f32.mrf.mxu0
    %v1008 = vadd.f32 0.0, %v1007
    %v1009 = vpop.f32.mrf.mxu0
    %v1010 = vadd.f32 0.0, %v1009
    %v1011 = vpop.f32.mrf.mxu0
    %v1012 = vpop.f32.mrf.mxu0
    %1013 = vdwg.mxu0
    %v1030 = vunpack.c.l.b16 %v860
    %v1031 = vunpack.c.h.b16 %v860
    %v1032 = vunpack.c.l.b16 %v861
    %v1033 = vunpack.c.h.b16 %v861
    %v1034 = vunpack.c.l.b16 %v862
    %v1035 = vunpack.c.h.b16 %v862
    %v1036 = vunpack.c.l.b16 %v863
    %v1037 = vunpack.c.h.b16 %v863
    %v1038 = vunpack.c.l.b16 %v864
    %v1039 = vunpack.c.h.b16 %v864
    %v1040 = vunpack.c.l.b16 %v865
    %v1041 = vunpack.c.h.b16 %v865
    %v1042 = vunpack.c.l.b16 %v866
    %v1043 = vunpack.c.h.b16 %v866
    %v1044 = vunpack.c.l.b16 %v867
    %v1045 = vunpack.c.h.b16 %v867
    %v1046 = vunpack.c.l.b16 %v868
    %v1047 = vunpack.c.h.b16 %v868
    %v1048 = vunpack.c.l.b16 %v869
    %v1049 = vunpack.c.h.b16 %v869
    %v1050 = vunpack.c.l.b16 %v870
    %v1051 = vunpack.c.h.b16 %v870
    %v1052 = vunpack.c.l.b16 %v871
    %v1053 = vunpack.c.h.b16 %v871
    %v1054 = vunpack.c.l.b16 %v872
    %v1055 = vunpack.c.h.b16 %v872
    %v1056 = vunpack.c.l.b16 %v873
    %v1057 = vunpack.c.h.b16 %v873
    %v1058 = vunpack.c.l.b16 %v874
    %v1059 = vunpack.c.h.b16 %v874
    %v1060 = vunpack.c.l.b16 %v875
    %v1061 = vunpack.c.h.b16 %v875
    %v1062 = vpack.c.b16 %v1032, %v1030
    %v1063 = vpack.c.b16 %v1033, %v1031
    %v1064 = vpack.c.b16 %v1036, %v1034
    %v1065 = vpack.c.b16 %v1037, %v1035
    %v1066 = vpack.c.b16 %v1040, %v1038
    %v1067 = vpack.c.b16 %v1041, %v1039
    %v1068 = vpack.c.b16 %v1044, %v1042
    %v1069 = vpack.c.b16 %v1045, %v1043
    %v1070 = vpack.c.b16 %v1048, %v1046
    %v1071 = vpack.c.b16 %v1049, %v1047
    %v1072 = vpack.c.b16 %v1052, %v1050
    %v1073 = vpack.c.b16 %v1053, %v1051
    %v1074 = vpack.c.b16 %v1056, %v1054
    %v1075 = vpack.c.b16 %v1057, %v1055
    %v1076 = vpack.c.b16 %v1060, %v1058
    %v1077 = vpack.c.b16 %v1061, %v1059
    %1094 = vmatprep.subr.bf16.mxu0 %v1077
    %1095 = vmatpush1.bf16.msra.mxu0 %v1076
    %1096 = vmatprep.subr.bf16.mxu0 %v1075
    %1097 = vmatpush1.bf16.msra.mxu0 %v1074
    %1098 = vmatprep.subr.bf16.mxu0 %v1073
    %1099 = vmatpush1.bf16.msra.mxu0 %v1072
    %1100 = vmatprep.subr.bf16.mxu0 %v1071
    %1101 = vmatpush1.bf16.msra.mxu0 %v1070
    %1102 = vmatprep.subr.bf16.mxu0 %v1069
    %1103 = vmatpush1.bf16.msra.mxu0 %v1068
    %1104 = vmatprep.subr.bf16.mxu0 %v1067
    %1105 = vmatpush1.bf16.msra.mxu0 %v1066
    %1106 = vmatprep.subr.bf16.mxu0 %v1065
    %1107 = vmatpush1.bf16.msra.mxu0 %v1064
    %1108 = vmatprep.subr.bf16.mxu0 %v1063
    %1109 = vmatpush1.bf16.msra.mxu0 %v1062
    %1110 = vmatprep.subr.bf16.mxu0 0
    %1111 = vmatpush2.bf16.msra.mxu0 0
    %1112 = vmatprep.subr.bf16.mxu0 0
    %1113 = vmatpush2.bf16.msra.mxu0 0
    %1114 = vmatprep.subr.bf16.mxu0 0
    %1115 = vmatpush2.bf16.msra.mxu0 0
    %1116 = vmatprep.subr.bf16.mxu0 0
    %1117 = vmatpush2.bf16.msra.mxu0 0
    %1118 = vmatprep.subr.bf16.mxu0 0
    %1119 = vmatpush2.bf16.msra.mxu0 0
    %1120 = vmatprep.subr.bf16.mxu0 0
    %1121 = vmatpush2.bf16.msra.mxu0 0
    %1122 = vmatprep.subr.bf16.mxu0 0
    %1123 = vmatpush2.bf16.msra.mxu0 0
    %1124 = vmatprep.subr.bf16.mxu0 0
    %1125 = vmatpush2.bf16.msra.mxu0 0
    %1126 = vmatprep.mubr.bf16.mxu0 0
    %1127 = vmatmul.mubr.bf16.gmra.mxu0 %v859
    %v1128 = vpop.f32.mrf.mxu0
    %v1129 = vadd.f32 %v1008, %v1128
    %v1130 = vpop.f32.mrf.mxu0
    %v1131 = vadd.f32 %v1010, %v1130
    %v1132 = vpop.f32.mrf.mxu0
    %v1133 = vpop.f32.mrf.mxu0
    %1134 = vdwg.mxu0
    %v1135 = vld [vmem:[#allocation17] sm:$0x3]
    %v1137 = vlaneseq
    %v1138 = vshrl.u32 %v1137, 7
    %v1139 = vsub.s32 0, %v1138
    %v1140 = vrot.slane %v1135, %v1139
    %v1141 = vlaneseq
    %v1142 = vshrl.u32 %v1141, 7
    %v1143 = vsub.s32 1, %v1142
    %v1144 = vrot.slane %v1135, %v1143
    %v1147 = vadd.f32 %v1129, %v1140
    %v1148 = vadd.f32 %v1131, %v1144
    %v1149 = vmax.f32 %v1147, 0.0
    %v1150 = vmax.f32 %v1148, 0.0
    %v1151 = vpack.c.bf16 %v1149, %v1149
    %v1152 = vpack.c.bf16 %v1150, %v1150
    %v1153 = vld [vmem:[#allocation18] sm:$0xff]
    %v1154 = vld [vmem:[#allocation18 + $0x8] sm:$0xff]
    %v1155 = vld [vmem:[#allocation18 + $0x10] sm:$0xff]
    %v1156 = vld [vmem:[#allocation18 + $0x18] sm:$0xff]
    %v1157 = vld [vmem:[#allocation18 + $0x20] sm:$0xff]
    %v1158 = vld [vmem:[#allocation18 + $0x28] sm:$0xff]
    %v1159 = vld [vmem:[#allocation18 + $0x30] sm:$0xff]
    %v1160 = vld [vmem:[#allocation18 + $0x38] sm:$0xff]
    %v1161 = vld [vmem:[#allocation18 + $0x40] sm:$0xff]
    %v1162 = vld [vmem:[#allocation18 + $0x48] sm:$0xff]
    %v1163 = vld [vmem:[#allocation18 + $0x50] sm:$0xff]
    %v1164 = vld [vmem:[#allocation18 + $0x58] sm:$0xff]
    %v1165 = vld [vmem:[#allocation18 + $0x60] sm:$0xff]
    %v1166 = vld [vmem:[#allocation18 + $0x68] sm:$0xff]
    %v1167 = vld [vmem:[#allocation18 + $0x70] sm:$0xff]
    %v1168 = vld [vmem:[#allocation18 + $0x78] sm:$0xff]
    %v1169 = vld [vmem:[#allocation18 + $0x80] sm:$0xff]
    %v1170 = vld [vmem:[#allocation18 + $0x88] sm:$0xff]
    %v1171 = vld [vmem:[#allocation18 + $0x90] sm:$0xff]
    %v1172 = vld [vmem:[#allocation18 + $0x98] sm:$0xff]
    %v1173 = vld [vmem:[#allocation18 + $0xa0] sm:$0xff]
    %v1174 = vld [vmem:[#allocation18 + $0xa8] sm:$0xff]
    %v1175 = vld [vmem:[#allocation18 + $0xb0] sm:$0xff]
    %v1176 = vld [vmem:[#allocation18 + $0xb8] sm:$0xff]
    %v1177 = vld [vmem:[#allocation18 + $0xc0] sm:$0xff]
    %v1178 = vld [vmem:[#allocation18 + $0xc8] sm:$0xff]
    %v1179 = vld [vmem:[#allocation18 + $0xd0] sm:$0xff]
    %v1180 = vld [vmem:[#allocation18 + $0xd8] sm:$0xff]
    %v1181 = vld [vmem:[#allocation18 + $0xe0] sm:$0xff]
    %v1182 = vld [vmem:[#allocation18 + $0xe8] sm:$0xff]
    %v1183 = vld [vmem:[#allocation18 + $0xf0] sm:$0xff]
    %v1184 = vld [vmem:[#allocation18 + $0xf8] sm:$0xff]
    %v1185 = vld [vmem:[#allocation20] sm:$0x3]
    %v1187 = vlaneseq
    %v1188 = vshrl.u32 %v1187, 7
    %v1189 = vsub.s32 0, %v1188
    %v1190 = vrot.slane %v1185, %v1189
    %v1191 = vlaneseq
    %v1192 = vshrl.u32 %v1191, 7
    %v1193 = vsub.s32 1, %v1192
    %v1194 = vrot.slane %v1185, %v1193
    %v1229 = vunpack.c.l.b16 %v1153
    %v1230 = vunpack.c.h.b16 %v1153
    %v1231 = vunpack.c.l.b16 %v1154
    %v1232 = vunpack.c.h.b16 %v1154
    %v1233 = vunpack.c.l.b16 %v1155
    %v1234 = vunpack.c.h.b16 %v1155
    %v1235 = vunpack.c.l.b16 %v1156
    %v1236 = vunpack.c.h.b16 %v1156
    %v1237 = vunpack.c.l.b16 %v1157
    %v1238 = vunpack.c.h.b16 %v1157
    %v1239 = vunpack.c.l.b16 %v1158
    %v1240 = vunpack.c.h.b16 %v1158
    %v1241 = vunpack.c.l.b16 %v1159
    %v1242 = vunpack.c.h.b16 %v1159
    %v1243 = vunpack.c.l.b16 %v1160
    %v1244 = vunpack.c.h.b16 %v1160
    %v1245 = vunpack.c.l.b16 %v1161
    %v1246 = vunpack.c.h.b16 %v1161
    %v1247 = vunpack.c.l.b16 %v1162
    %v1248 = vunpack.c.h.b16 %v1162
    %v1249 = vunpack.c.l.b16 %v1163
    %v1250 = vunpack.c.h.b16 %v1163
    %v1251 = vunpack.c.l.b16 %v1164
    %v1252 = vunpack.c.h.b16 %v1164
    %v1253 = vunpack.c.l.b16 %v1165
    %v1254 = vunpack.c.h.b16 %v1165
    %v1255 = vunpack.c.l.b16 %v1166
    %v1256 = vunpack.c.h.b16 %v1166
    %v1257 = vunpack.c.l.b16 %v1167
    %v1258 = vunpack.c.h.b16 %v1167
    %v1259 = vunpack.c.l.b16 %v1168
    %v1260 = vunpack.c.h.b16 %v1168
    %v1261 = vunpack.c.l.b16 %v1169
    %v1262 = vunpack.c.h.b16 %v1169
    %v1263 = vunpack.c.l.b16 %v1170
    %v1264 = vunpack.c.h.b16 %v1170
    %v1265 = vunpack.c.l.b16 %v1171
    %v1266 = vunpack.c.h.b16 %v1171
    %v1267 = vunpack.c.l.b16 %v1172
    %v1268 = vunpack.c.h.b16 %v1172
    %v1269 = vunpack.c.l.b16 %v1173
    %v1270 = vunpack.c.h.b16 %v1173
    %v1271 = vunpack.c.l.b16 %v1174
    %v1272 = vunpack.c.h.b16 %v1174
    %v1273 = vunpack.c.l.b16 %v1175
    %v1274 = vunpack.c.h.b16 %v1175
    %v1275 = vunpack.c.l.b16 %v1176
    %v1276 = vunpack.c.h.b16 %v1176
    %v1277 = vunpack.c.l.b16 %v1177
    %v1278 = vunpack.c.h.b16 %v1177
    %v1279 = vunpack.c.l.b16 %v1178
    %v1280 = vunpack.c.h.b16 %v1178
    %v1281 = vunpack.c.l.b16 %v1179
    %v1282 = vunpack.c.h.b16 %v1179
    %v1283 = vunpack.c.l.b16 %v1180
    %v1284 = vunpack.c.h.b16 %v1180
    %v1285 = vunpack.c.l.b16 %v1181
    %v1286 = vunpack.c.h.b16 %v1181
    %v1287 = vunpack.c.l.b16 %v1182
    %v1288 = vunpack.c.h.b16 %v1182
    %v1289 = vunpack.c.l.b16 %v1183
    %v1290 = vunpack.c.h.b16 %v1183
    %v1291 = vunpack.c.l.b16 %v1184
    %v1292 = vunpack.c.h.b16 %v1184
    %v1293 = vpack.c.b16 %v1231, %v1229
    %v1294 = vpack.c.b16 %v1232, %v1230
    %v1295 = vpack.c.b16 %v1235, %v1233
    %v1296 = vpack.c.b16 %v1236, %v1234
    %v1297 = vpack.c.b16 %v1239, %v1237
    %v1298 = vpack.c.b16 %v1240, %v1238
    %v1299 = vpack.c.b16 %v1243, %v1241
    %v1300 = vpack.c.b16 %v1244, %v1242
    %v1301 = vpack.c.b16 %v1247, %v1245
    %v1302 = vpack.c.b16 %v1248, %v1246
    %v1303 = vpack.c.b16 %v1251, %v1249
    %v1304 = vpack.c.b16 %v1252, %v1250
    %v1305 = vpack.c.b16 %v1255, %v1253
    %v1306 = vpack.c.b16 %v1256, %v1254
    %v1307 = vpack.c.b16 %v1259, %v1257
    %v1308 = vpack.c.b16 %v1260, %v1258
    %v1309 = vpack.c.b16 %v1263, %v1261
    %v1310 = vpack.c.b16 %v1264, %v1262
    %v1311 = vpack.c.b16 %v1267, %v1265
    %v1312 = vpack.c.b16 %v1268, %v1266
    %v1313 = vpack.c.b16 %v1271, %v1269
    %v1314 = vpack.c.b16 %v1272, %v1270
    %v1315 = vpack.c.b16 %v1275, %v1273
    %v1316 = vpack.c.b16 %v1276, %v1274
    %v1317 = vpack.c.b16 %v1279, %v1277
    %v1318 = vpack.c.b16 %v1280, %v1278
    %v1319 = vpack.c.b16 %v1283, %v1281
    %v1320 = vpack.c.b16 %v1284, %v1282
    %v1321 = vpack.c.b16 %v1287, %v1285
    %v1322 = vpack.c.b16 %v1288, %v1286
    %v1323 = vpack.c.b16 %v1291, %v1289
    %v1324 = vpack.c.b16 %v1292, %v1290
    %1357 = vmatprep.subr.bf16.mxu0 %v1308
    %1358 = vmatpush1.bf16.msra.mxu0 %v1307
    %1359 = vmatprep.subr.bf16.mxu0 %v1306
    %1360 = vmatpush1.bf16.msra.mxu0 %v1305
    %1361 = vmatprep.subr.bf16.mxu0 %v1304
    %1362 = vmatpush1.bf16.msra.mxu0 %v1303
    %1363 = vmatprep.subr.bf16.mxu0 %v1302
    %1364 = vmatpush1.bf16.msra.mxu0 %v1301
    %1365 = vmatprep.subr.bf16.mxu0 %v1300
    %1366 = vmatpush1.bf16.msra.mxu0 %v1299
    %1367 = vmatprep.subr.bf16.mxu0 %v1298
    %1368 = vmatpush1.bf16.msra.mxu0 %v1297
    %1369 = vmatprep.subr.bf16.mxu0 %v1296
    %1370 = vmatpush1.bf16.msra.mxu0 %v1295
    %1371 = vmatprep.subr.bf16.mxu0 %v1294
    %1372 = vmatpush1.bf16.msra.mxu0 %v1293
    %1373 = vmatprep.subr.bf16.mxu0 %v1324
    %1374 = vmatpush2.bf16.msra.mxu0 %v1323
    %1375 = vmatprep.subr.bf16.mxu0 %v1322
    %1376 = vmatpush2.bf16.msra.mxu0 %v1321
    %1377 = vmatprep.subr.bf16.mxu0 %v1320
    %1378 = vmatpush2.bf16.msra.mxu0 %v1319
    %1379 = vmatprep.subr.bf16.mxu0 %v1318
    %1380 = vmatpush2.bf16.msra.mxu0 %v1317
    %1381 = vmatprep.subr.bf16.mxu0 %v1316
    %1382 = vmatpush2.bf16.msra.mxu0 %v1315
    %1383 = vmatprep.subr.bf16.mxu0 %v1314
    %1384 = vmatpush2.bf16.msra.mxu0 %v1313
    %1385 = vmatprep.subr.bf16.mxu0 %v1312
    %1386 = vmatpush2.bf16.msra.mxu0 %v1311
    %1387 = vmatprep.subr.bf16.mxu0 %v1310
    %1388 = vmatpush2.bf16.msra.mxu0 %v1309
    %1389 = vmatprep.mubr.bf16.mxu0 %v1152
    %1390 = vmatmul.mubr.bf16.gmra.mxu0 %v1151
    %v1391 = vpop.f32.mrf.mxu0
    %v1392 = vadd.f32 %v1190, %v1391
    %v1393 = vpop.f32.mrf.mxu0
    %v1394 = vadd.f32 %v1194, %v1393
    %v1395 = vpop.f32.mrf.mxu0
    %v1396 = vpop.f32.mrf.mxu0
    %1397 = vdwg.mxu0
    %v1398 = vtanh.pop %v1392
    %v1399 = vtanh.pop %v1394
    %v1400 = vpack.c.bf16 %v1398, %v1398
    %v1401 = vpack.c.bf16 %v1399, %v1399
    %v1402 = vld [vmem:[#allocation21] sm:$0xf]
    %v1403 = vld [vmem:[#allocation21 + $0x4] sm:$0xf]
    %v1404 = vld [vmem:[#allocation21 + $0x8] sm:$0xf]
    %v1405 = vld [vmem:[#allocation21 + $0xc] sm:$0xf]
    %v1406 = vld [vmem:[#allocation21 + $0x10] sm:$0xf]
    %v1407 = vld [vmem:[#allocation21 + $0x14] sm:$0xf]
    %v1408 = vld [vmem:[#allocation21 + $0x18] sm:$0xf]
    %v1409 = vld [vmem:[#allocation21 + $0x1c] sm:$0xf]
    %v1410 = vld [vmem:[#allocation21 + $0x20] sm:$0xf]
    %v1411 = vld [vmem:[#allocation21 + $0x24] sm:$0xf]
    %v1412 = vld [vmem:[#allocation21 + $0x28] sm:$0xf]
    %v1413 = vld [vmem:[#allocation21 + $0x2c] sm:$0xf]
    %v1414 = vld [vmem:[#allocation21 + $0x30] sm:$0xf]
    %v1415 = vld [vmem:[#allocation21 + $0x34] sm:$0xf]
    %v1416 = vld [vmem:[#allocation21 + $0x38] sm:$0xf]
    %v1417 = vld [vmem:[#allocation21 + $0x3c] sm:$0xf]
    %v1418 = vld [vmem:[#allocation21 + $0x40] sm:$0xf]
    %v1419 = vld [vmem:[#allocation21 + $0x44] sm:$0xf]
    %v1420 = vld [vmem:[#allocation21 + $0x48] sm:$0xf]
    %v1421 = vld [vmem:[#allocation21 + $0x4c] sm:$0xf]
    %v1422 = vld [vmem:[#allocation21 + $0x50] sm:$0xf]
    %v1423 = vld [vmem:[#allocation21 + $0x54] sm:$0xf]
    %v1424 = vld [vmem:[#allocation21 + $0x58] sm:$0xf]
    %v1425 = vld [vmem:[#allocation21 + $0x5c] sm:$0xf]
    %v1426 = vld [vmem:[#allocation21 + $0x60] sm:$0xf]
    %v1427 = vld [vmem:[#allocation21 + $0x64] sm:$0xf]
    %v1428 = vld [vmem:[#allocation21 + $0x68] sm:$0xf]
    %v1429 = vld [vmem:[#allocation21 + $0x6c] sm:$0xf]
    %v1430 = vld [vmem:[#allocation21 + $0x70] sm:$0xf]
    %v1431 = vld [vmem:[#allocation21 + $0x74] sm:$0xf]
    %v1432 = vld [vmem:[#allocation21 + $0x78] sm:$0xf]
    %v1433 = vld [vmem:[#allocation21 + $0x7c] sm:$0xf]
    %v1434 = vld [vmem:[#allocation23] sm:$0xf]
    %v1435 = vld [vmem:[#allocation23 + $0x4] sm:$0xf]
    %v1436 = vld [vmem:[#allocation23 + $0x8] sm:$0xf]
    %v1437 = vld [vmem:[#allocation23 + $0xc] sm:$0xf]
    %v1438 = vld [vmem:[#allocation23 + $0x10] sm:$0xf]
    %v1439 = vld [vmem:[#allocation23 + $0x14] sm:$0xf]
    %v1440 = vld [vmem:[#allocation23 + $0x18] sm:$0xf]
    %v1441 = vld [vmem:[#allocation23 + $0x1c] sm:$0xf]
    %v1442 = vld [vmem:[#allocation23 + $0x20] sm:$0xf]
    %v1443 = vld [vmem:[#allocation23 + $0x24] sm:$0xf]
    %v1444 = vld [vmem:[#allocation23 + $0x28] sm:$0xf]
    %v1445 = vld [vmem:[#allocation23 + $0x2c] sm:$0xf]
    %v1446 = vld [vmem:[#allocation23 + $0x30] sm:$0xf]
    %v1447 = vld [vmem:[#allocation23 + $0x34] sm:$0xf]
    %v1448 = vld [vmem:[#allocation23 + $0x38] sm:$0xf]
    %v1449 = vld [vmem:[#allocation23 + $0x3c] sm:$0xf]
    %v1466 = vunpack.c.l.b16 %v1434
    %v1467 = vunpack.c.l.b16 %v1435
    %v1468 = vunpack.c.l.b16 %v1436
    %v1469 = vunpack.c.l.b16 %v1437
    %v1470 = vunpack.c.l.b16 %v1438
    %v1471 = vunpack.c.l.b16 %v1439
    %v1472 = vunpack.c.l.b16 %v1440
    %v1473 = vunpack.c.l.b16 %v1441
    %v1474 = vunpack.c.l.b16 %v1442
    %v1475 = vunpack.c.l.b16 %v1443
    %v1476 = vunpack.c.l.b16 %v1444
    %v1477 = vunpack.c.l.b16 %v1445
    %v1478 = vunpack.c.l.b16 %v1446
    %v1479 = vunpack.c.l.b16 %v1447
    %v1480 = vunpack.c.l.b16 %v1448
    %v1481 = vunpack.c.l.b16 %v1449
    %v1482 = vpack.c.b16 %v1467, %v1466
    %v1483 = vpack.c.b16 %v1469, %v1468
    %v1484 = vpack.c.b16 %v1471, %v1470
    %v1485 = vpack.c.b16 %v1473, %v1472
    %v1486 = vpack.c.b16 %v1475, %v1474
    %v1487 = vpack.c.b16 %v1477, %v1476
    %v1488 = vpack.c.b16 %v1479, %v1478
    %v1489 = vpack.c.b16 %v1481, %v1480
    %1498 = vmatprep.subr.bf16.mxu0 0
    %1499 = vmatpush1.bf16.msra.mxu0 %v1489
    %1500 = vmatprep.subr.bf16.mxu0 0
    %1501 = vmatpush1.bf16.msra.mxu0 %v1488
    %1502 = vmatprep.subr.bf16.mxu0 0
    %1503 = vmatpush1.bf16.msra.mxu0 %v1487
    %1504 = vmatprep.subr.bf16.mxu0 0
    %1505 = vmatpush1.bf16.msra.mxu0 %v1486
    %1506 = vmatprep.subr.bf16.mxu0 0
    %1507 = vmatpush1.bf16.msra.mxu0 %v1485
    %1508 = vmatprep.subr.bf16.mxu0 0
    %1509 = vmatpush1.bf16.msra.mxu0 %v1484
    %1510 = vmatprep.subr.bf16.mxu0 0
    %1511 = vmatpush1.bf16.msra.mxu0 %v1483
    %1512 = vmatprep.subr.bf16.mxu0 0
    %1513 = vmatpush1.bf16.msra.mxu0 %v1482
    %1514 = vmatprep.subr.bf16.mxu0 0
    %1515 = vmatpush2.bf16.msra.mxu0 0
    %1516 = vmatprep.subr.bf16.mxu0 0
    %1517 = vmatpush2.bf16.msra.mxu0 0
    %1518 = vmatprep.subr.bf16.mxu0 0
    %1519 = vmatpush2.bf16.msra.mxu0 0
    %1520 = vmatprep.subr.bf16.mxu0 0
    %1521 = vmatpush2.bf16.msra.mxu0 0
    %1522 = vmatprep.subr.bf16.mxu0 0
    %1523 = vmatpush2.bf16.msra.mxu0 0
    %1524 = vmatprep.subr.bf16.mxu0 0
    %1525 = vmatpush2.bf16.msra.mxu0 0
    %1526 = vmatprep.subr.bf16.mxu0 0
    %1527 = vmatpush2.bf16.msra.mxu0 0
    %1528 = vmatprep.subr.bf16.mxu0 0
    %1529 = vmatpush2.bf16.msra.mxu0 0
    %1530 = vmatprep.mubr.bf16.mxu0 0
    %1531 = vmatmul.mubr.bf16.gmra.mxu0 %v876
    %v1532 = vpop.f32.mrf.mxu0
    %v1533 = vadd.f32 0.0, %v1532
    %v1534 = vpop.f32.mrf.mxu0
    %v1535 = vpop.f32.mrf.mxu0
    %v1536 = vpop.f32.mrf.mxu0
    %1537 = vdwg.mxu0
    %v1570 = vunpack.c.l.b16 %v1402
    %v1571 = vunpack.c.l.b16 %v1403
    %v1572 = vunpack.c.l.b16 %v1404
    %v1573 = vunpack.c.l.b16 %v1405
    %v1574 = vunpack.c.l.b16 %v1406
    %v1575 = vunpack.c.l.b16 %v1407
    %v1576 = vunpack.c.l.b16 %v1408
    %v1577 = vunpack.c.l.b16 %v1409
    %v1578 = vunpack.c.l.b16 %v1410
    %v1579 = vunpack.c.l.b16 %v1411
    %v1580 = vunpack.c.l.b16 %v1412
    %v1581 = vunpack.c.l.b16 %v1413
    %v1582 = vunpack.c.l.b16 %v1414
    %v1583 = vunpack.c.l.b16 %v1415
    %v1584 = vunpack.c.l.b16 %v1416
    %v1585 = vunpack.c.l.b16 %v1417
    %v1586 = vunpack.c.l.b16 %v1418
    %v1587 = vunpack.c.l.b16 %v1419
    %v1588 = vunpack.c.l.b16 %v1420
    %v1589 = vunpack.c.l.b16 %v1421
    %v1590 = vunpack.c.l.b16 %v1422
    %v1591 = vunpack.c.l.b16 %v1423
    %v1592 = vunpack.c.l.b16 %v1424
    %v1593 = vunpack.c.l.b16 %v1425
    %v1594 = vunpack.c.l.b16 %v1426
    %v1595 = vunpack.c.l.b16 %v1427
    %v1596 = vunpack.c.l.b16 %v1428
    %v1597 = vunpack.c.l.b16 %v1429
    %v1598 = vunpack.c.l.b16 %v1430
    %v1599 = vunpack.c.l.b16 %v1431
    %v1600 = vunpack.c.l.b16 %v1432
    %v1601 = vunpack.c.l.b16 %v1433
    %v1602 = vpack.c.b16 %v1571, %v1570
    %v1603 = vpack.c.b16 %v1573, %v1572
    %v1604 = vpack.c.b16 %v1575, %v1574
    %v1605 = vpack.c.b16 %v1577, %v1576
    %v1606 = vpack.c.b16 %v1579, %v1578
    %v1607 = vpack.c.b16 %v1581, %v1580
    %v1608 = vpack.c.b16 %v1583, %v1582
    %v1609 = vpack.c.b16 %v1585, %v1584
    %v1610 = vpack.c.b16 %v1587, %v1586
    %v1611 = vpack.c.b16 %v1589, %v1588
    %v1612 = vpack.c.b16 %v1591, %v1590
    %v1613 = vpack.c.b16 %v1593, %v1592
    %v1614 = vpack.c.b16 %v1595, %v1594
    %v1615 = vpack.c.b16 %v1597, %v1596
    %v1616 = vpack.c.b16 %v1599, %v1598
    %v1617 = vpack.c.b16 %v1601, %v1600
    %1634 = vmatprep.subr.bf16.mxu0 0
    %1635 = vmatpush1.bf16.msra.mxu0 %v1609
    %1636 = vmatprep.subr.bf16.mxu0 0
    %1637 = vmatpush1.bf16.msra.mxu0 %v1608
    %1638 = vmatprep.subr.bf16.mxu0 0
    %1639 = vmatpush1.bf16.msra.mxu0 %v1607
    %1640 = vmatprep.subr.bf16.mxu0 0
    %1641 = vmatpush1.bf16.msra.mxu0 %v1606
    %1642 = vmatprep.subr.bf16.mxu0 0
    %1643 = vmatpush1.bf16.msra.mxu0 %v1605
    %1644 = vmatprep.subr.bf16.mxu0 0
    %1645 = vmatpush1.bf16.msra.mxu0 %v1604
    %1646 = vmatprep.subr.bf16.mxu0 0
    %1647 = vmatpush1.bf16.msra.mxu0 %v1603
    %1648 = vmatprep.subr.bf16.mxu0 0
    %1649 = vmatpush1.bf16.msra.mxu0 %v1602
    %1650 = vmatprep.subr.bf16.mxu0 0
    %1651 = vmatpush2.bf16.msra.mxu0 %v1617
    %1652 = vmatprep.subr.bf16.mxu0 0
    %1653 = vmatpush2.bf16.msra.mxu0 %v1616
    %1654 = vmatprep.subr.bf16.mxu0 0
    %1655 = vmatpush2.bf16.msra.mxu0 %v1615
    %1656 = vmatprep.subr.bf16.mxu0 0
    %1657 = vmatpush2.bf16.msra.mxu0 %v1614
    %1658 = vmatprep.subr.bf16.mxu0 0
    %1659 = vmatpush2.bf16.msra.mxu0 %v1613
    %1660 = vmatprep.subr.bf16.mxu0 0
    %1661 = vmatpush2.bf16.msra.mxu0 %v1612
    %1662 = vmatprep.subr.bf16.mxu0 0
    %1663 = vmatpush2.bf16.msra.mxu0 %v1611
    %1664 = vmatprep.subr.bf16.mxu0 0
    %1665 = vmatpush2.bf16.msra.mxu0 %v1610
    %1666 = vmatprep.mubr.bf16.mxu0 %v1401
    %1667 = vmatmul.mubr.bf16.gmra.mxu0 %v1400
    %v1668 = vpop.f32.mrf.mxu0
    %v1669 = vadd.f32 %v1533, %v1668
    %v1670 = vpop.f32.mrf.mxu0
    %v1671 = vpop.f32.mrf.mxu0
    %v1672 = vpop.f32.mrf.mxu0
    %1673 = vdwg.mxu0
    %v1674 = vld [vmem:[#allocation24] sm:$0x1]
    %v1676 = vlaneseq
    %v1677 = vshrl.u32 %v1676, 7
    %v1678 = vsub.s32 0, %v1677
    %v1679 = vrot.slane %v1674, %v1678
    %v1681 = vadd.f32 %v1669, %v1679
    %v1682 = vmax.f32 %v1681, 0.0
    %v1683 = vld [vmem:[%s18] sm:$0x1]
    %v1684 = vunpack.c.l.bf16 %v1683
    %v1685 = vlaneseq
    %v1686 = vshrl.u32 %v1685, 7
    %v1687 = vsub.s32 0, %v1686
    %v1688 = vrot.slane %v1684, %v1687
    %v1689 = vmul.f32 %v1682, %v1688
    %1690 = vadd.xlane.f32.xlu0 %v1689
    %v1691 = vpop.xlane.xlu0 %1690
    %v1692 = vld [vmem:[#allocation2] sm:$0x1]
    %v1694 = vlaneseq
    %v1695 = vshrl.u32 %v1694, 7
    %v1696 = vsub.s32 0, %v1695
    %v1697 = vrot.slane %v1692, %v1696
    %v1699 = vadd.f32 %v1691, %v1697
    %v1700 = vxor.u32 %v1699, 2147483648
    %v1701 = vmul.f32 %v1700, 1.442695
    %v1702 = vpow.pop %v1701
    %v1703 = vadd.f32 %v1702, 1.0
    %v1704 = vrcp.pop %v1703
    %v1705 = vmul.f32 1.0, %v1704
    %1706 = vst [vmem:[#allocation26] sm:$0xff] %v1398
    %1707 = vst [vmem:[#allocation26 + $0x8] sm:$0xff] %v1399
    %vm1708 = vcmask 7168
    %1709 = vst.msk [vmem:[%s21] sm:$0xff] %vm1708, %v1705
    // Predicated region
    $region138: #{emotional_encoding_forward.1} parent=1 // pred_check
      _
    $region139: #{emotional_encoding_forward.1} parent=1 // pred_check_branch
      %1711 = sbr.rel (0) target = $region141
    $region140: #{emotional_encoding_forward.1} parent=1 // pred_region
      %s1713 = ssub.s32 256, 256
      %1714 = vsyncadd [#allocation5], %s1713
      %s1716 = sshll.u32 [#allocation26], 4
      %s1717 = int_to_ptr.vmem [resolvable:$true] %s1716
      %1719 = dma.vmem_to_hbm [thread:$0]  %s1717, 256, %s20, [#allocation5]
    $region141: #{emotional_encoding_forward.1} parent=1 // pred_fallthru
      _
    // Predicated region
    $region142: #{emotional_encoding_forward.1} parent=1 // pred_check
      _
    $region143: #{emotional_encoding_forward.1} parent=1 // pred_check_branch
      %1721 = sbr.rel (0) target = $region145
    $region144: #{emotional_encoding_forward.1} parent=1 // pred_region
      _
    $region145: #{emotional_encoding_forward.1} parent=1 // pred_fallthru
      _
    // Predicated region
    $region146: #{emotional_encoding_forward.1} parent=1 // pred_check
      _
    $region147: #{emotional_encoding_forward.1} parent=1 // pred_check_branch
      %1723 = sbr.rel (0) target = $region149
    $region148: #{emotional_encoding_forward.1} parent=1 // pred_region
      %1724 = dma.done [#allocation5], 256
    $region149: #{emotional_encoding_forward.1} parent=1 // pred_fallthru
      _
    // Predicated region
    $region150: #{emotional_encoding_forward.1} parent=1 // pred_check
      _
    $region151: #{emotional_encoding_forward.1} parent=1 // pred_check_branch
      %1726 = sbr.rel (0) target = $region153
    $region152: #{emotional_encoding_forward.1} parent=1 // pred_region
      _
    $region153: #{emotional_encoding_forward.1} parent=1 // pred_fallthru
      _
    %1727 = vsyncpa [#allocation4], 1
    %1728 = vsyncpa [#allocation7], 1
    %1729 = vsyncpa [#allocation10], 1
    %1730 = vsyncpa [#allocation13], 1
    %1731 = vsyncpa [#allocation16], 1
    %1732 = vsyncpa [#allocation19], 1
    %1733 = vsyncpa [#allocation22], 1
    %1734 = vsyncpa [#allocation25], 1
    %1735 = vsyncpa [#allocation5], 1

</llo_original>
